<compile_context>
chip_gen: v7x
topology: tpu7x:2x2x1
jax: 0.10.0
libtpu: 0.0.40
codegen_flags: <defaults>
</compile_context>

<pallas_src>
import numpy as np
import jax
import jax.numpy as jnp
from jax import lax
from jax.experimental import pallas as pl
from jax.experimental.pallas import tpu as pltpu

_PAD = 16  # sublane padding rows around the stage-1 scratch (bf16 tile = 16 sublanes)


def _decoder_kernel(x_ref, w1_ref, s1_ref, c1_ref, wdp_ref, s2_ref, c2_ref,
                    w3_ref, s3_ref, c3_ref, out_ref, h1_ref):
    _, _, W, Cin = x_ref.shape
    TH = out_ref.shape[1]
    C2out = out_ref.shape[4]          # = 2 * Cout  (px folded into lanes)
    C4 = w1_ref.shape[1]
    M = (TH + 2) * W                  # stage-1 rows incl. 1-row halo on each side
    N = TH * W                        # pre-upsample pixels of this row tile

    r0 = pl.program_id(1) * TH        # first (unpadded) image row of this tile
    if TH % 8 == 0:
        r0 = pl.multiple_of(r0, 8)

    # ---- stage 1: 1x1 conv + folded BN + ReLU over TH+2 halo'd rows --------
    xt = x_ref[0, pl.ds(r0, TH + 2)]                       # (TH+2, W, Cin) bf16
    h1 = jnp.dot(xt.reshape(M, Cin), w1_ref[...],
                 preferred_element_type=jnp.float32)       # (M, C4) f32 accumulate
    h1 = jnp.maximum(h1 * s1_ref[...] + c1_ref[...], 0.0)
    h1_ref[_PAD:_PAD + M] = h1.astype(jnp.bfloat16)
    # Padding rows around the tile so every shifted slice below is a static,
    # in-range read of the scratch (their values are also edge-masked).
    h1_ref[0:_PAD] = jnp.zeros((_PAD, C4), jnp.bfloat16)
    h1_ref[_PAD + M:_PAD + M + _PAD] = jnp.zeros((_PAD, C4), jnp.bfloat16)

    # ConvTranspose2d implicit zero padding: zero halo rows outside the image.
    # Only the first / last row tile needs it; interior tiles skip (pl.when).
    @pl.when(pl.program_id(1) == 0)
    def _():
        h1_ref[_PAD:_PAD + W] = jnp.zeros((W, C4), jnp.bfloat16)

    @pl.when(pl.program_id(1) == pl.num_programs(1) - 1)
    def _():
        h1_ref[_PAD + M - W:_PAD + M] = jnp.zeros((W, C4), jnp.bfloat16)

    col = lax.broadcasted_iota(jnp.int32, (N, 1), 0) % W
    left_edge = col == 0
    right_edge = col == W - 1

    patches = {}

    def patch(dy, dx):        # patch[n] = h1[n + (1+dy)*W + dx], zero outside
        if (dy, dx) not in patches:
            start = _PAD + (1 + dy) * W + dx
            p = h1_ref[start:start + N]                    # (N, C4) bf16
            if dx == -1:
                p = jnp.where(left_edge, jnp.zeros_like(p), p)
            elif dx == 1:
                p = jnp.where(right_edge, jnp.zeros_like(p), p)
            patches[(dy, dx)] = p
        return patches[(dy, dx)]

    # ---- stage 2 (deconv, fused 4-tap matmul per phase) + stage 3 (1x1 conv)
    # Column phases px live on the lane axis; row phase py picks the output
    # interleave slot so the wrapper reshape to (B, 2H, 2W, Cout) is free.
    for py in range(2):
        dys = (-1, 0) if py == 0 else (0, 1)
        h2_parts = []
        for px in range(2):
            dxs = (-1, 0) if px == 0 else (0, 1)
            cat = jnp.concatenate([patch(dy, dx) for dy in dys for dx in dxs],
                                  axis=-1)                 # (N, 4*C4) bf16
            h2_parts.append(jnp.dot(cat, wdp_ref[2 * py + px],
                                    preferred_element_type=jnp.float32))
        h2 = jnp.concatenate(h2_parts, axis=-1)            # (N, 2*C4) f32
        h2 = jnp.maximum(h2 * s2_ref[...] + c2_ref[...], 0.0)
        h3 = jnp.dot(h2.astype(jnp.bfloat16), w3_ref[...],
                     preferred_element_type=jnp.float32)   # (N, 2*Cout) f32
        h3 = jnp.maximum(h3 * s3_ref[...] + c3_ref[...], 0.0)
        out_ref[0, :, py:py + 1, :, :] = (
            h3.astype(jnp.bfloat16).reshape(TH, 1, W, C2out))


def _fold_bn(bn_stats, conv_bias, eps):
    gamma, beta, mean, var = bn_stats
    s = gamma / jnp.sqrt(var + eps)
    c = s * (conv_bias - mean) + beta
    return s.astype(jnp.float32), c.astype(jnp.float32)


def _vmem_budget_bytes():
    cap = 64 * 1024 * 1024                      # conservative default (v7x-class)
    try:
        info = pltpu.get_tpu_info()
        v = getattr(info, "vmem_capacity_bytes", None)
        if v:
            cap = int(v)
    except Exception:
        pass
    return (cap * 3) // 4                       # leave headroom for the compiler


def _pick_row_tile(B, H, W, Cin, C4, Cout, budget):
    cands = []
    for c in (H, 256, 128, 64, 32, 16, 8, 4, 2, 1):
        if 0 < c <= H and H % c == 0 and c not in cands:
            cands.append(c)

    def est(th):                                # rough per-core VMEM model (bytes)
        M = (th + 2) * W
        N = th * W
        x_res = 2 * (H + 2) * W * Cin * 2       # resident padded input, 2 buffers
        out_buf = 2 * th * W * 4 * Cout * 2     # bf16 output, double-buffered
        h1_scr = (M + 2 * _PAD) * C4 * 2
        work = (M * Cin * 2 + M * C4 * 4 + 9 * N * C4 * 2
                + 2 * N * 4 * C4 * 2 + N * 2 * C4 * 4 + N * 2 * Cout * 4)
        return x_res + out_buf + h1_scr + int(1.25 * work) + (2 << 20)

    fitting = [c for c in cands if est(c) <= budget] or [cands[-1]]
    row_tile = fitting[0]
    # Megacore balance (v7x has 2 TCs): prefer >= 2 parallel grid points.
    if B * (H // row_tile) < 2:
        for c in fitting:
            if B * (H // c) >= 2:
                row_tile = c
                break
    return row_tile


def decoder_block_forward_nhwc(x, params, eps=1e-5, row_tile=None):
    """x: (B, H, W, Cin) NHWC.  Returns (B, 2H, 2W, Cout) NHWC bfloat16."""
    B, H, W, Cin = x.shape
    C4 = Cin // 4
    Cout = params['conv3_w'].shape[0]

    budget = _vmem_budget_bytes()
    if row_tile is None:
        row_tile = _pick_row_tile(B, H, W, Cin, C4, Cout, budget)
    assert H % row_tile == 0, (H, row_tile)
    n_rt = H // row_tile

    # 1-row zero pad top/bottom (halo); bf16 cast folded into the same pass.
    # TODO(synk): for very large H*W*Cin on 64 MiB-VMEM parts, switch the input
    # to memory_space=pl.ANY with a manually double-buffered halo-slab DMA
    # instead of keeping the whole padded image resident.
    x_pad = jnp.pad(x.astype(jnp.bfloat16), ((0, 0), (1, 1), (0, 0), (0, 0)))

    w1 = params['conv1_w'][:, :, 0, 0].T.astype(jnp.bfloat16)     # (Cin, C4)
    w3 = params['conv3_w'][:, :, 0, 0].T                          # (C4, Cout) f32
    s1, c1 = _fold_bn(params['bn1'], params['conv1_b'], eps)
    s2, c2 = _fold_bn(params['bn2'], params['deconv_b'], eps)
    s3, c3 = _fold_bn(params['bn3'], params['conv3_b'], eps)
    s1 = s1.reshape(1, C4)
    c1 = c1.reshape(1, C4)
    # Column phases (px = 0/1) live on lanes -> tile stage-2/3 BN params 2x.
    s2 = jnp.tile(s2.reshape(1, C4), (1, 2))
    c2 = jnp.tile(c2.reshape(1, C4), (1, 2))
    s3 = jnp.tile(s3.reshape(1, Cout), (1, 2))
    c3 = jnp.tile(c3.reshape(1, Cout), (1, 2))

    # Per-phase stacked deconv weights: taps (ty, tx) stacked along K.
    # ConvTranspose2d(k=4,s=2,p=1): out[2m+py, 2n+px] <- in rows {m-1,m} (py=0,
    # taps ky={3,1}) or {m,m+1} (py=1, taps ky={2,0}); same for px/kx.
    wd_t = jnp.transpose(params['deconv_w'], (2, 3, 0, 1))        # (ky,kx,Ci,Co)
    phase_w = []
    for py in range(2):
        for px in range(2):
            taps = []
            for ty in range(2):
                ky = (3 - 2 * ty) if py == 0 else (2 - 2 * ty)
                for tx in range(2):
                    kx = (3 - 2 * tx) if px == 0 else (2 - 2 * tx)
                    taps.append(wd_t[ky, kx])
            phase_w.append(jnp.concatenate(taps, axis=0))          # (4*C4, C4)
    wdp = jnp.stack(phase_w, axis=0).astype(jnp.bfloat16)          # (4, 4*C4, C4)

    # Block-diagonal 1x1-conv weight: both column phases come out of one matmul
    # already in the (px, c) lane order of the store.
    zero = jnp.zeros_like(w3)
    w3_bd = jnp.concatenate(
        [jnp.concatenate([w3, zero], axis=1),
         jnp.concatenate([zero, w3], axis=1)], axis=0).astype(jnp.bfloat16)

    M = (row_tile + 2) * W
    flops = 2 * B * H * W * (Cin * C4 + 16 * C4 * C4 + 8 * C4 * Cout)
    bytes_accessed = int(x_pad.size * 2
                         + (w1.size + wdp.size + w3_bd.size) * 2
                         + B * H * W * 4 * Cout * 2)

    out = pl.pallas_call(
        _decoder_kernel,
        out_shape=jax.ShapeDtypeStruct((B, H, 2, W, 2 * Cout), jnp.bfloat16),
        grid_spec=pltpu.PrefetchScalarGridSpec(
            num_scalar_prefetch=0,
            grid=(B, n_rt),
            in_specs=[
                pl.BlockSpec((1, H + 2, W, Cin), lambda b, r: (b, 0, 0, 0)),
                pl.BlockSpec((Cin, C4), lambda b, r: (0, 0)),
                pl.BlockSpec((1, C4), lambda b, r: (0, 0)),
                pl.BlockSpec((1, C4), lambda b, r: (0, 0)),
                pl.BlockSpec((4, 4 * C4, C4), lambda b, r: (0, 0, 0)),
                pl.BlockSpec((1, 2 * C4), lambda b, r: (0, 0)),
                pl.BlockSpec((1, 2 * C4), lambda b, r: (0, 0)),
                pl.BlockSpec((2 * C4, 2 * Cout), lambda b, r: (0, 0)),
                pl.BlockSpec((1, 2 * Cout), lambda b, r: (0, 0)),
                pl.BlockSpec((1, 2 * Cout), lambda b, r: (0, 0)),
            ],
            out_specs=pl.BlockSpec((1, row_tile, 2, W, 2 * Cout),
                                   lambda b, r: (b, r, 0, 0, 0)),
            scratch_shapes=[pltpu.VMEM((M + 2 * _PAD, C4), jnp.bfloat16)],
        ),
        compiler_params=pltpu.CompilerParams(
            dimension_semantics=("parallel", "parallel"),
            vmem_limit_bytes=int(budget)),
        cost_estimate=pl.CostEstimate(flops=flops, transcendentals=0,
                                      bytes_accessed=bytes_accessed),
    )(x_pad, w1, s1, c1, wdp, s2, c2, w3_bd, s3, c3)

    # (B, H, 2, W, 2*Cout) -> (B, 2H, 2W, Cout): pure row-major merge, no copy.
    return out.reshape(B, 2 * H, 2 * W, Cout)


def decoder_block_forward(x_nchw, params, eps=1e-5, row_tile=None):
    """NCHW-compatible wrapper (PyTorch layout parity); NHWC path has no transposes."""
    x = jnp.transpose(x_nchw, (0, 2, 3, 1))
    y = decoder_block_forward_nhwc(x, params, eps=eps, row_tile=row_tile)
    return jnp.transpose(y, (0, 3, 1, 2)).astype(jnp.float32)


def init_params(key, in_channels, n_filters):
    C4 = in_channels // 4
    ks = jax.random.split(key, 9)

    def bn(k, c):
        kg, kb, km, kv = jax.random.split(k, 4)
        gamma = 1.0 + 0.1 * jax.random.normal(kg, (c,), jnp.float32)
        beta = 0.1 * jax.random.normal(kb, (c,), jnp.float32)
        mean = 0.1 * jax.random.normal(km, (c,), jnp.float32)
        var = jnp.abs(jax.random.normal(kv, (c,), jnp.float32)) + 0.5
        return (gamma, beta, mean, var)

    return dict(
        conv1_w=0.1 * jax.random.normal(ks[0], (C4, in_channels, 1, 1), jnp.float32),
        conv1_b=0.1 * jax.random.normal(ks[1], (C4,), jnp.float32),
        bn1=bn(ks[2], C4),
        deconv_w=0.1 * jax.random.normal(ks[3], (C4, C4, 4, 4), jnp.float32),
        deconv_b=0.1 * jax.random.normal(ks[4], (C4,), jnp.float32),
        bn2=bn(ks[5], C4),
        conv3_w=0.1 * jax.random.normal(ks[6], (n_filters, C4, 1, 1), jnp.float32),
        conv3_b=0.1 * jax.random.normal(ks[7], (n_filters,), jnp.float32),
        bn3=bn(ks[8], n_filters),
    )


def reference_forward(x, p, eps=1e-5):
    """Pure-JAX (lax.conv) reference mirroring the PyTorch eval-mode forward."""
    def bn(y, stats):
        g, b, m, v = stats
        s = (g / jnp.sqrt(v + eps))[None, :, None, None]
        return (y - m[None, :, None, None]) * s + b[None, :, None, None]

    dn = ('NCHW', 'OIHW', 'NCHW')
    y = lax.conv_general_dilated(x, p['conv1_w'], (1, 1), 'VALID',
                                 dimension_numbers=dn)
    y = jnp.maximum(bn(y + p['conv1_b'][None, :, None, None], p['bn1']), 0.0)
    # ConvTranspose2d(k=4, s=2, p=1) == dilated conv with flipped kernel.
    wdc = jnp.flip(p['deconv_w'], axis=(2, 3)).transpose(1, 0, 2, 3)
    y = lax.conv_general_dilated(y, wdc, (1, 1), [(2, 2), (2, 2)],
                                 lhs_dilation=(2, 2), dimension_numbers=dn)
    y = jnp.maximum(bn(y + p['deconv_b'][None, :, None, None], p['bn2']), 0.0)
    y = lax.conv_general_dilated(y, p['conv3_w'], (1, 1), 'VALID',
                                 dimension_numbers=dn)
    y = jnp.maximum(bn(y + p['conv3_b'][None, :, None, None], p['bn3']), 0.0)
    return y


if __name__ == "__main__":
    key = jax.random.PRNGKey(0)
    kx, kp = jax.random.split(key)
    in_channels, n_filters = 16, 8
    B, H, W = 2, 16, 16

    x = jax.random.normal(kx, (B, in_channels, H, W), jnp.float32)
    params = init_params(kp, in_channels, n_filters)

    # row_tile=4 -> grid (2, 4): exercises first, interior and last row tiles.
    out = decoder_block_forward(x, params, row_tile=4)
    out = jax.block_until_ready(out)

    ref = reference_forward(x, params)
    assert out.shape == (B, n_filters, 2 * H, 2 * W), out.shape
    # bf16 MXU inputs / bf16 output with f32 accumulation -> loosened tolerance.
    np.testing.assert_allclose(np.asarray(out), np.asarray(ref),
                               rtol=2e-2, atol=2e-2)
    print("KERNEL_OK")
</pallas_src>

<mosaic_0001>
module attributes {stable_mosaic.version = 11 : i64} {
  func.func @_decoder_kernel(%arg0: i32, %arg1: i32, %arg2: memref<1x18x16x16xbf16, #tpu.memory_space<vmem>>, %arg3: memref<16x4xbf16, #tpu.memory_space<vmem>>, %arg4: memref<1x4xf32, #tpu.memory_space<vmem>>, %arg5: memref<1x4xf32, #tpu.memory_space<vmem>>, %arg6: memref<4x16x4xbf16, #tpu.memory_space<vmem>>, %arg7: memref<1x8xf32, #tpu.memory_space<vmem>>, %arg8: memref<1x8xf32, #tpu.memory_space<vmem>>, %arg9: memref<8x16xbf16, #tpu.memory_space<vmem>>, %arg10: memref<1x16xf32, #tpu.memory_space<vmem>>, %arg11: memref<1x16xf32, #tpu.memory_space<vmem>>, %arg12: memref<1x4x2x16x16xbf16, #tpu.memory_space<vmem>>, %arg13: memref<128x4xbf16, #tpu.memory_space<vmem>>) attributes {dimension_semantics = [#tpu.dimension_semantics<parallel>, #tpu.dimension_semantics<parallel>], iteration_bounds = array<i64: 2, 4>, scalar_prefetch = 0 : i64, scratch_operands = 1 : i64, tpu.core_type = #tpu.core_type<tc>, window_params = [{transform_indices = @transform_0, window_bounds = array<i64: 1, 18, 16, 16>}, {pipeline_mode = #tpu.pipeline_mode<synchronous>, transform_indices = @transform_1, window_bounds = array<i64: 16, 4>}, {pipeline_mode = #tpu.pipeline_mode<synchronous>, transform_indices = @transform_2, window_bounds = array<i64: 1, 4>}, {pipeline_mode = #tpu.pipeline_mode<synchronous>, transform_indices = @transform_3, window_bounds = array<i64: 1, 4>}, {pipeline_mode = #tpu.pipeline_mode<synchronous>, transform_indices = @transform_4, window_bounds = array<i64: 4, 16, 4>}, {pipeline_mode = #tpu.pipeline_mode<synchronous>, transform_indices = @transform_5, window_bounds = array<i64: 1, 8>}, {pipeline_mode = #tpu.pipeline_mode<synchronous>, transform_indices = @transform_6, window_bounds = array<i64: 1, 8>}, {pipeline_mode = #tpu.pipeline_mode<synchronous>, transform_indices = @transform_7, window_bounds = array<i64: 8, 16>}, {pipeline_mode = #tpu.pipeline_mode<synchronous>, transform_indices = @transform_8, window_bounds = array<i64: 1, 16>}, {pipeline_mode = #tpu.pipeline_mode<synchronous>, transform_indices = @transform_9, window_bounds = array<i64: 1, 16>}, {transform_indices = @transform_10, window_bounds = array<i64: 1, 4, 2, 16, 16>}]} {
    %c4_i32 = arith.constant 4 : i32
    %0 = arith.muli %arg1, %c4_i32 : i32
    %c0 = arith.constant 0 : index
    %1 = arith.index_cast %0 : i32 to index
    %c0_0 = arith.constant 0 : index
    %c0_1 = arith.constant 0 : index
    %2 = vector.load %arg2[%c0, %1, %c0_0, %c0_1] : memref<1x18x16x16xbf16, #tpu.memory_space<vmem>>, vector<1x6x16x16xbf16>
    %3 = vector.shape_cast %2 : vector<1x6x16x16xbf16> to vector<6x16x16xbf16>
    %4 = vector.shape_cast %3 : vector<6x16x16xbf16> to vector<96x16xbf16>
    %c0_2 = arith.constant 0 : index
    %c0_3 = arith.constant 0 : index
    %5 = vector.load %arg3[%c0_2, %c0_3] : memref<16x4xbf16, #tpu.memory_space<vmem>>, vector<16x4xbf16>
    %cst = arith.constant dense<0.000000e+00> : vector<96x4xf32>
    %6 = tpu.matmul %4, %5, %cst {dimension_numbers = #tpu.dot_dimension_numbers<[1], [0], [0], [1], [0, 0, 1, 1], [], []>} : vector<96x16xbf16>, vector<16x4xbf16>, vector<96x4xf32> -> vector<96x4xf32>
    %c0_4 = arith.constant 0 : index
    %c0_5 = arith.constant 0 : index
    %7 = vector.load %arg4[%c0_4, %c0_5] : memref<1x4xf32, #tpu.memory_space<vmem>>, vector<1x4xf32>
    %8 = vector.broadcast %7 : vector<1x4xf32> to vector<96x4xf32>
    %9 = arith.mulf %6, %8 : vector<96x4xf32>
    %c0_6 = arith.constant 0 : index
    %c0_7 = arith.constant 0 : index
    %10 = vector.load %arg5[%c0_6, %c0_7] : memref<1x4xf32, #tpu.memory_space<vmem>>, vector<1x4xf32>
    %11 = vector.broadcast %10 : vector<1x4xf32> to vector<96x4xf32>
    %12 = arith.addf %9, %11 : vector<96x4xf32>
    %cst_8 = arith.constant 0.000000e+00 : f32
    %13 = vector.broadcast %cst_8 : f32 to vector<96x4xf32>
    %14 = arith.maximumf %12, %13 : vector<96x4xf32>
    %15 = arith.truncf %14 : vector<96x4xf32> to vector<96x4xbf16>
    %c16 = arith.constant 16 : index
    %c0_9 = arith.constant 0 : index
    %16 = vector.load %arg13[%c16, %c0_9] : memref<128x4xbf16, #tpu.memory_space<vmem>>, vector<96x4xbf16>
    tpu.vector_store %arg13[%c16, %c0_9], %15 {strides = array<i32>} : memref<128x4xbf16, #tpu.memory_space<vmem>>, vector<96x4xbf16>,
    %cst_10 = arith.constant 0.000000e+00 : bf16
    %17 = vector.broadcast %cst_10 : bf16 to vector<16x4xbf16>
    %c0_11 = arith.constant 0 : index
    %c0_12 = arith.constant 0 : index
    %18 = vector.load %arg13[%c0_11, %c0_12] : memref<128x4xbf16, #tpu.memory_space<vmem>>, vector<16x4xbf16>
    tpu.vector_store %arg13[%c0_11, %c0_12], %17 {strides = array<i32>} : memref<128x4xbf16, #tpu.memory_space<vmem>>, vector<16x4xbf16>,
    %cst_13 = arith.constant 0.000000e+00 : bf16
    %19 = vector.broadcast %cst_13 : bf16 to vector<16x4xbf16>
    %c112 = arith.constant 112 : index
    %c0_14 = arith.constant 0 : index
    %20 = vector.load %arg13[%c112, %c0_14] : memref<128x4xbf16, #tpu.memory_space<vmem>>, vector<16x4xbf16>
    tpu.vector_store %arg13[%c112, %c0_14], %19 {strides = array<i32>} : memref<128x4xbf16, #tpu.memory_space<vmem>>, vector<16x4xbf16>,
    %c0_i32 = arith.constant 0 : i32
    %21 = arith.cmpi eq, %arg1, %c0_i32 : i32
    %22 = arith.extui %21 : i1 to i32
    %c0_i32_15 = arith.constant 0 : i32
    %23 = arith.cmpi ne, %22, %c0_i32_15 : i32
    scf.if %23 {
      %cst_87 = arith.constant 0.000000e+00 : bf16
      %147 = vector.broadcast %cst_87 : bf16 to vector<16x4xbf16>
      %c16_88 = arith.constant 16 : index
      %c0_89 = arith.constant 0 : index
      %148 = vector.load %arg13[%c16_88, %c0_89] : memref<128x4xbf16, #tpu.memory_space<vmem>>, vector<16x4xbf16>
      tpu.vector_store %arg13[%c16_88, %c0_89], %147 {strides = array<i32>} : memref<128x4xbf16, #tpu.memory_space<vmem>>, vector<16x4xbf16>,
    } else {
    }
    %c3_i32 = arith.constant 3 : i32
    %24 = arith.cmpi eq, %arg1, %c3_i32 : i32
    %25 = arith.extui %24 : i1 to i32
    %c0_i32_16 = arith.constant 0 : i32
    %26 = arith.cmpi ne, %25, %c0_i32_16 : i32
    scf.if %26 {
      %cst_87 = arith.constant 0.000000e+00 : bf16
      %147 = vector.broadcast %cst_87 : bf16 to vector<16x4xbf16>
      %c96 = arith.constant 96 : index
      %c0_88 = arith.constant 0 : index
      %148 = vector.load %arg13[%c96, %c0_88] : memref<128x4xbf16, #tpu.memory_space<vmem>>, vector<16x4xbf16>
      tpu.vector_store %arg13[%c96, %c0_88], %147 {strides = array<i32>} : memref<128x4xbf16, #tpu.memory_space<vmem>>, vector<16x4xbf16>,
    } else {
    }
    %27 = tpu.iota {dimensions = array<i32: 0>} : vector<64x1xi32>
    %c16_i32 = arith.constant 16 : i32
    %c0_i32_17 = arith.constant 0 : i32
    %28 = arith.cmpi eq, %c16_i32, %c0_i32_17 : i32
    %c1_i32 = arith.constant 1 : i32
    %29 = arith.select %28, %c1_i32, %c16_i32 : i32
    %30 = vector.broadcast %29 : i32 to vector<64x1xi32>
    %31 = arith.remsi %27, %30 : vector<64x1xi32>
    %c0_i32_18 = arith.constant 0 : i32
    %32 = vector.broadcast %c0_i32_18 : i32 to vector<64x1xi32>
    %33 = arith.cmpi ne, %31, %32 : vector<64x1xi32>
    %c0_i32_19 = arith.constant 0 : i32
    %34 = vector.broadcast %c0_i32_19 : i32 to vector<64x1xi32>
    %35 = arith.cmpi slt, %31, %34 : vector<64x1xi32>
    %c0_i32_20 = arith.constant 0 : i32
    %36 = arith.cmpi slt, %29, %c0_i32_20 : i32
    %37 = vector.broadcast %36 : i1 to vector<64x1xi1>
    %38 = vector.broadcast %37 : vector<64x1xi1> to vector<64x1xi1>
    %39 = arith.xori %35, %38 : vector<64x1xi1>
    %40 = arith.andi %39, %33 : vector<64x1xi1>
    %41 = vector.broadcast %29 : i32 to vector<64x1xi32>
    %42 = arith.addi %31, %41 : vector<64x1xi32>
    %43 = arith.select %40, %42, %31 : vector<64x1xi1>, vector<64x1xi32>
    %c0_i32_21 = arith.constant 0 : i32
    %44 = vector.broadcast %c0_i32_21 : i32 to vector<64x1xi32>
    %45 = arith.cmpi eq, %43, %44 : vector<64x1xi32>
    %c15_i32 = arith.constant 15 : i32
    %46 = vector.broadcast %c15_i32 : i32 to vector<64x1xi32>
    %47 = arith.cmpi eq, %43, %46 : vector<64x1xi32>
    %c15 = arith.constant 15 : index
    %c0_22 = arith.constant 0 : index
    %48 = vector.load %arg13[%c15, %c0_22] : memref<128x4xbf16, #tpu.memory_space<vmem>>, vector<64x4xbf16>
    %cst_23 = arith.constant 0.000000e+00 : bf16
    %49 = vector.broadcast %cst_23 : bf16 to vector<64x4xbf16>
    %50 = vector.shape_cast %45 : vector<64x1xi1> to vector<64x1xi1>
    %51 = vector.broadcast %50 : vector<64x1xi1> to vector<64x4xi1>
    %52 = arith.select %51, %49, %48 : vector<64x4xi1>, vector<64x4xbf16>
    %c16_24 = arith.constant 16 : index
    %c0_25 = arith.constant 0 : index
    %53 = vector.load %arg13[%c16_24, %c0_25] : memref<128x4xbf16, #tpu.memory_space<vmem>>, vector<64x4xbf16>
    %c31 = arith.constant 31 : index
    %c0_26 = arith.constant 0 : index
    %54 = vector.load %arg13[%c31, %c0_26] : memref<128x4xbf16, #tpu.memory_space<vmem>>, vector<64x4xbf16>
    %cst_27 = arith.constant 0.000000e+00 : bf16
    %55 = vector.broadcast %cst_27 : bf16 to vector<64x4xbf16>
    %56 = vector.shape_cast %45 : vector<64x1xi1> to vector<64x1xi1>
    %57 = vector.broadcast %56 : vector<64x1xi1> to vector<64x4xi1>
    %58 = arith.select %57, %55, %54 : vector<64x4xi1>, vector<64x4xbf16>
    %c32 = arith.constant 32 : index
    %c0_28 = arith.constant 0 : index
    %59 = vector.load %arg13[%c32, %c0_28] : memref<128x4xbf16, #tpu.memory_space<vmem>>, vector<64x4xbf16>
    %60 = tpu.concatenate %52, %53, %58, %59 in 1 : vector<64x4xbf16>, vector<64x4xbf16>, vector<64x4xbf16>, vector<64x4xbf16> -> vector<64x16xbf16>
    %c0_29 = arith.constant 0 : index
    %c0_30 = arith.constant 0 : index
    %c0_31 = arith.constant 0 : index
    %61 = vector.load %arg6[%c0_29, %c0_30, %c0_31] : memref<4x16x4xbf16, #tpu.memory_space<vmem>>, vector<1x16x4xbf16>
    %62 = vector.shape_cast %61 : vector<1x16x4xbf16> to vector<16x4xbf16>
    %cst_32 = arith.constant dense<0.000000e+00> : vector<64x4xf32>
    %63 = tpu.matmul %60, %62, %cst_32 {dimension_numbers = #tpu.dot_dimension_numbers<[1], [0], [0], [1], [0, 0, 1, 1], [], []>} : vector<64x16xbf16>, vector<16x4xbf16>, vector<64x4xf32> -> vector<64x4xf32>
    %c17 = arith.constant 17 : index
    %c0_33 = arith.constant 0 : index
    %64 = vector.load %arg13[%c17, %c0_33] : memref<128x4xbf16, #tpu.memory_space<vmem>>, vector<64x4xbf16>
    %cst_34 = arith.constant 0.000000e+00 : bf16
    %65 = vector.broadcast %cst_34 : bf16 to vector<64x4xbf16>
    %66 = vector.shape_cast %47 : vector<64x1xi1> to vector<64x1xi1>
    %67 = vector.broadcast %66 : vector<64x1xi1> to vector<64x4xi1>
    %68 = arith.select %67, %65, %64 : vector<64x4xi1>, vector<64x4xbf16>
    %c33 = arith.constant 33 : index
    %c0_35 = arith.constant 0 : index
    %69 = vector.load %arg13[%c33, %c0_35] : memref<128x4xbf16, #tpu.memory_space<vmem>>, vector<64x4xbf16>
    %cst_36 = arith.constant 0.000000e+00 : bf16
    %70 = vector.broadcast %cst_36 : bf16 to vector<64x4xbf16>
    %71 = vector.shape_cast %47 : vector<64x1xi1> to vector<64x1xi1>
    %72 = vector.broadcast %71 : vector<64x1xi1> to vector<64x4xi1>
    %73 = arith.select %72, %70, %69 : vector<64x4xi1>, vector<64x4xbf16>
    %74 = tpu.concatenate %53, %68, %59, %73 in 1 : vector<64x4xbf16>, vector<64x4xbf16>, vector<64x4xbf16>, vector<64x4xbf16> -> vector<64x16xbf16>
    %c1 = arith.constant 1 : index
    %c0_37 = arith.constant 0 : index
    %c0_38 = arith.constant 0 : index
    %75 = vector.load %arg6[%c1, %c0_37, %c0_38] : memref<4x16x4xbf16, #tpu.memory_space<vmem>>, vector<1x16x4xbf16>
    %76 = vector.shape_cast %75 : vector<1x16x4xbf16> to vector<16x4xbf16>
    %cst_39 = arith.constant dense<0.000000e+00> : vector<64x4xf32>
    %77 = tpu.matmul %74, %76, %cst_39 {dimension_numbers = #tpu.dot_dimension_numbers<[1], [0], [0], [1], [0, 0, 1, 1], [], []>} : vector<64x16xbf16>, vector<16x4xbf16>, vector<64x4xf32> -> vector<64x4xf32>
    %78 = tpu.concatenate %63, %77 in 1 : vector<64x4xf32>, vector<64x4xf32> -> vector<64x8xf32>
    %c0_40 = arith.constant 0 : index
    %c0_41 = arith.constant 0 : index
    %79 = vector.load %arg7[%c0_40, %c0_41] : memref<1x8xf32, #tpu.memory_space<vmem>>, vector<1x8xf32>
    %80 = vector.broadcast %79 : vector<1x8xf32> to vector<64x8xf32>
    %81 = arith.mulf %78, %80 : vector<64x8xf32>
    %c0_42 = arith.constant 0 : index
    %c0_43 = arith.constant 0 : index
    %82 = vector.load %arg8[%c0_42, %c0_43] : memref<1x8xf32, #tpu.memory_space<vmem>>, vector<1x8xf32>
    %83 = vector.broadcast %82 : vector<1x8xf32> to vector<64x8xf32>
    %84 = arith.addf %81, %83 : vector<64x8xf32>
    %cst_44 = arith.constant 0.000000e+00 : f32
    %85 = vector.broadcast %cst_44 : f32 to vector<64x8xf32>
    %86 = arith.maximumf %84, %85 : vector<64x8xf32>
    %87 = arith.truncf %86 : vector<64x8xf32> to vector<64x8xbf16>
    %c0_45 = arith.constant 0 : index
    %c0_46 = arith.constant 0 : index
    %88 = vector.load %arg9[%c0_45, %c0_46] : memref<8x16xbf16, #tpu.memory_space<vmem>>, vector<8x16xbf16>
    %cst_47 = arith.constant dense<0.000000e+00> : vector<64x16xf32>
    %89 = tpu.matmul %87, %88, %cst_47 {dimension_numbers = #tpu.dot_dimension_numbers<[1], [0], [0], [1], [0, 0, 1, 1], [], []>} : vector<64x8xbf16>, vector<8x16xbf16>, vector<64x16xf32> -> vector<64x16xf32>
    %c0_48 = arith.constant 0 : index
    %c0_49 = arith.constant 0 : index
    %90 = vector.load %arg10[%c0_48, %c0_49] : memref<1x16xf32, #tpu.memory_space<vmem>>, vector<1x16xf32>
    %91 = vector.broadcast %90 : vector<1x16xf32> to vector<64x16xf32>
    %92 = arith.mulf %89, %91 : vector<64x16xf32>
    %c0_50 = arith.constant 0 : index
    %c0_51 = arith.constant 0 : index
    %93 = vector.load %arg11[%c0_50, %c0_51] : memref<1x16xf32, #tpu.memory_space<vmem>>, vector<1x16xf32>
    %94 = vector.broadcast %93 : vector<1x16xf32> to vector<64x16xf32>
    %95 = arith.addf %92, %94 : vector<64x16xf32>
    %cst_52 = arith.constant 0.000000e+00 : f32
    %96 = vector.broadcast %cst_52 : f32 to vector<64x16xf32>
    %97 = arith.maximumf %95, %96 : vector<64x16xf32>
    %98 = arith.truncf %97 : vector<64x16xf32> to vector<64x16xbf16>
    %99 = vector.shape_cast %98 : vector<64x16xbf16> to vector<4x1x16x16xbf16>
    %c0_53 = arith.constant 0 : index
    %c0_54 = arith.constant 0 : index
    %c0_55 = arith.constant 0 : index
    %c0_56 = arith.constant 0 : index
    %c0_57 = arith.constant 0 : index
    %100 = vector.load %arg12[%c0_53, %c0_54, %c0_55, %c0_56, %c0_57] : memref<1x4x2x16x16xbf16, #tpu.memory_space<vmem>>, vector<1x4x1x16x16xbf16>
    %101 = vector.shape_cast %100 : vector<1x4x1x16x16xbf16> to vector<4x1x16x16xbf16>
    %102 = vector.shape_cast %99 : vector<4x1x16x16xbf16> to vector<1x4x1x16x16xbf16>
    tpu.vector_store %arg12[%c0_53, %c0_54, %c0_55, %c0_56, %c0_57], %102 {strides = array<i32>} : memref<1x4x2x16x16xbf16, #tpu.memory_space<vmem>>, vector<1x4x1x16x16xbf16>,
    %c47 = arith.constant 47 : index
    %c0_58 = arith.constant 0 : index
    %103 = vector.load %arg13[%c47, %c0_58] : memref<128x4xbf16, #tpu.memory_space<vmem>>, vector<64x4xbf16>
    %cst_59 = arith.constant 0.000000e+00 : bf16
    %104 = vector.broadcast %cst_59 : bf16 to vector<64x4xbf16>
    %105 = vector.shape_cast %45 : vector<64x1xi1> to vector<64x1xi1>
    %106 = vector.broadcast %105 : vector<64x1xi1> to vector<64x4xi1>
    %107 = arith.select %106, %104, %103 : vector<64x4xi1>, vector<64x4xbf16>
    %c48 = arith.constant 48 : index
    %c0_60 = arith.constant 0 : index
    %108 = vector.load %arg13[%c48, %c0_60] : memref<128x4xbf16, #tpu.memory_space<vmem>>, vector<64x4xbf16>
    %109 = tpu.concatenate %58, %59, %107, %108 in 1 : vector<64x4xbf16>, vector<64x4xbf16>, vector<64x4xbf16>, vector<64x4xbf16> -> vector<64x16xbf16>
    %c2 = arith.constant 2 : index
    %c0_61 = arith.constant 0 : index
    %c0_62 = arith.constant 0 : index
    %110 = vector.load %arg6[%c2, %c0_61, %c0_62] : memref<4x16x4xbf16, #tpu.memory_space<vmem>>, vector<1x16x4xbf16>
    %111 = vector.shape_cast %110 : vector<1x16x4xbf16> to vector<16x4xbf16>
    %cst_63 = arith.constant dense<0.000000e+00> : vector<64x4xf32>
    %112 = tpu.matmul %109, %111, %cst_63 {dimension_numbers = #tpu.dot_dimension_numbers<[1], [0], [0], [1], [0, 0, 1, 1], [], []>} : vector<64x16xbf16>, vector<16x4xbf16>, vector<64x4xf32> -> vector<64x4xf32>
    %c49 = arith.constant 49 : index
    %c0_64 = arith.constant 0 : index
    %113 = vector.load %arg13[%c49, %c0_64] : memref<128x4xbf16, #tpu.memory_space<vmem>>, vector<64x4xbf16>
    %cst_65 = arith.constant 0.000000e+00 : bf16
    %114 = vector.broadcast %cst_65 : bf16 to vector<64x4xbf16>
    %115 = vector.shape_cast %47 : vector<64x1xi1> to vector<64x1xi1>
    %116 = vector.broadcast %115 : vector<64x1xi1> to vector<64x4xi1>
    %117 = arith.select %116, %114, %113 : vector<64x4xi1>, vector<64x4xbf16>
    %118 = tpu.concatenate %59, %73, %108, %117 in 1 : vector<64x4xbf16>, vector<64x4xbf16>, vector<64x4xbf16>, vector<64x4xbf16> -> vector<64x16xbf16>
    %c3 = arith.constant 3 : index
    %c0_66 = arith.constant 0 : index
    %c0_67 = arith.constant 0 : index
    %119 = vector.load %arg6[%c3, %c0_66, %c0_67] : memref<4x16x4xbf16, #tpu.memory_space<vmem>>, vector<1x16x4xbf16>
    %120 = vector.shape_cast %119 : vector<1x16x4xbf16> to vector<16x4xbf16>
    %cst_68 = arith.constant dense<0.000000e+00> : vector<64x4xf32>
    %121 = tpu.matmul %118, %120, %cst_68 {dimension_numbers = #tpu.dot_dimension_numbers<[1], [0], [0], [1], [0, 0, 1, 1], [], []>} : vector<64x16xbf16>, vector<16x4xbf16>, vector<64x4xf32> -> vector<64x4xf32>
    %122 = tpu.concatenate %112, %121 in 1 : vector<64x4xf32>, vector<64x4xf32> -> vector<64x8xf32>
    %c0_69 = arith.constant 0 : index
    %c0_70 = arith.constant 0 : index
    %123 = vector.load %arg7[%c0_69, %c0_70] : memref<1x8xf32, #tpu.memory_space<vmem>>, vector<1x8xf32>
    %124 = vector.broadcast %123 : vector<1x8xf32> to vector<64x8xf32>
    %125 = arith.mulf %122, %124 : vector<64x8xf32>
    %c0_71 = arith.constant 0 : index
    %c0_72 = arith.constant 0 : index
    %126 = vector.load %arg8[%c0_71, %c0_72] : memref<1x8xf32, #tpu.memory_space<vmem>>, vector<1x8xf32>
    %127 = vector.broadcast %126 : vector<1x8xf32> to vector<64x8xf32>
    %128 = arith.addf %125, %127 : vector<64x8xf32>
    %cst_73 = arith.constant 0.000000e+00 : f32
    %129 = vector.broadcast %cst_73 : f32 to vector<64x8xf32>
    %130 = arith.maximumf %128, %129 : vector<64x8xf32>
    %131 = arith.truncf %130 : vector<64x8xf32> to vector<64x8xbf16>
    %c0_74 = arith.constant 0 : index
    %c0_75 = arith.constant 0 : index
    %132 = vector.load %arg9[%c0_74, %c0_75] : memref<8x16xbf16, #tpu.memory_space<vmem>>, vector<8x16xbf16>
    %cst_76 = arith.constant dense<0.000000e+00> : vector<64x16xf32>
    %133 = tpu.matmul %131, %132, %cst_76 {dimension_numbers = #tpu.dot_dimension_numbers<[1], [0], [0], [1], [0, 0, 1, 1], [], []>} : vector<64x8xbf16>, vector<8x16xbf16>, vector<64x16xf32> -> vector<64x16xf32>
    %c0_77 = arith.constant 0 : index
    %c0_78 = arith.constant 0 : index
    %134 = vector.load %arg10[%c0_77, %c0_78] : memref<1x16xf32, #tpu.memory_space<vmem>>, vector<1x16xf32>
    %135 = vector.broadcast %134 : vector<1x16xf32> to vector<64x16xf32>
    %136 = arith.mulf %133, %135 : vector<64x16xf32>
    %c0_79 = arith.constant 0 : index
    %c0_80 = arith.constant 0 : index
    %137 = vector.load %arg11[%c0_79, %c0_80] : memref<1x16xf32, #tpu.memory_space<vmem>>, vector<1x16xf32>
    %138 = vector.broadcast %137 : vector<1x16xf32> to vector<64x16xf32>
    %139 = arith.addf %136, %138 : vector<64x16xf32>
    %cst_81 = arith.constant 0.000000e+00 : f32
    %140 = vector.broadcast %cst_81 : f32 to vector<64x16xf32>
    %141 = arith.maximumf %139, %140 : vector<64x16xf32>
    %142 = arith.truncf %141 : vector<64x16xf32> to vector<64x16xbf16>
    %143 = vector.shape_cast %142 : vector<64x16xbf16> to vector<4x1x16x16xbf16>
    %c0_82 = arith.constant 0 : index
    %c0_83 = arith.constant 0 : index
    %c1_84 = arith.constant 1 : index
    %c0_85 = arith.constant 0 : index
    %c0_86 = arith.constant 0 : index
    %144 = vector.load %arg12[%c0_82, %c0_83, %c1_84, %c0_85, %c0_86] : memref<1x4x2x16x16xbf16, #tpu.memory_space<vmem>>, vector<1x4x1x16x16xbf16>
    %145 = vector.shape_cast %144 : vector<1x4x1x16x16xbf16> to vector<4x1x16x16xbf16>
    %146 = vector.shape_cast %143 : vector<4x1x16x16xbf16> to vector<1x4x1x16x16xbf16>
    tpu.vector_store %arg12[%c0_82, %c0_83, %c1_84, %c0_85, %c0_86], %146 {strides = array<i32>} : memref<1x4x2x16x16xbf16, #tpu.memory_space<vmem>>, vector<1x4x1x16x16xbf16>,
    return
  }
  func.func @transform_0(%arg0: i32, %arg1: i32) -> (i32, i32, i32, i32) {
    %c0_i32 = arith.constant 0 : i32
    %c0_i32_0 = arith.constant 0 : i32
    %c0_i32_1 = arith.constant 0 : i32
    %c0_i32_2 = arith.constant 0 : i32
    return %arg0, %c0_i32, %c0_i32_0, %c0_i32_1 : i32, i32, i32, i32
  }
  func.func @transform_1(%arg0: i32, %arg1: i32) -> (i32, i32) {
    %c0_i32 = arith.constant 0 : i32
    %c0_i32_0 = arith.constant 0 : i32
    %c0_i32_1 = arith.constant 0 : i32
    return %c0_i32, %c0_i32_0 : i32, i32
  }
  func.func @transform_2(%arg0: i32, %arg1: i32) -> (i32, i32) {
    %c0_i32 = arith.constant 0 : i32
    %c0_i32_0 = arith.constant 0 : i32
    %c0_i32_1 = arith.constant 0 : i32
    return %c0_i32, %c0_i32_0 : i32, i32
  }
  func.func @transform_3(%arg0: i32, %arg1: i32) -> (i32, i32) {
    %c0_i32 = arith.constant 0 : i32
    %c0_i32_0 = arith.constant 0 : i32
    %c0_i32_1 = arith.constant 0 : i32
    return %c0_i32, %c0_i32_0 : i32, i32
  }
  func.func @transform_4(%arg0: i32, %arg1: i32) -> (i32, i32, i32) {
    %c0_i32 = arith.constant 0 : i32
    %c0_i32_0 = arith.constant 0 : i32
    %c0_i32_1 = arith.constant 0 : i32
    %c0_i32_2 = arith.constant 0 : i32
    return %c0_i32, %c0_i32_0, %c0_i32_1 : i32, i32, i32
  }
  func.func @transform_5(%arg0: i32, %arg1: i32) -> (i32, i32) {
    %c0_i32 = arith.constant 0 : i32
    %c0_i32_0 = arith.constant 0 : i32
    %c0_i32_1 = arith.constant 0 : i32
    return %c0_i32, %c0_i32_0 : i32, i32
  }
  func.func @transform_6(%arg0: i32, %arg1: i32) -> (i32, i32) {
    %c0_i32 = arith.constant 0 : i32
    %c0_i32_0 = arith.constant 0 : i32
    %c0_i32_1 = arith.constant 0 : i32
    return %c0_i32, %c0_i32_0 : i32, i32
  }
  func.func @transform_7(%arg0: i32, %arg1: i32) -> (i32, i32) {
    %c0_i32 = arith.constant 0 : i32
    %c0_i32_0 = arith.constant 0 : i32
    %c0_i32_1 = arith.constant 0 : i32
    return %c0_i32, %c0_i32_0 : i32, i32
  }
  func.func @transform_8(%arg0: i32, %arg1: i32) -> (i32, i32) {
    %c0_i32 = arith.constant 0 : i32
    %c0_i32_0 = arith.constant 0 : i32
    %c0_i32_1 = arith.constant 0 : i32
    return %c0_i32, %c0_i32_0 : i32, i32
  }
  func.func @transform_9(%arg0: i32, %arg1: i32) -> (i32, i32) {
    %c0_i32 = arith.constant 0 : i32
    %c0_i32_0 = arith.constant 0 : i32
    %c0_i32_1 = arith.constant 0 : i32
    return %c0_i32, %c0_i32_0 : i32, i32
  }
  func.func @transform_10(%arg0: i32, %arg1: i32) -> (i32, i32, i32, i32, i32) {
    %c0_i32 = arith.constant 0 : i32
    %c0_i32_0 = arith.constant 0 : i32
    %c0_i32_1 = arith.constant 0 : i32
    %c0_i32_2 = arith.constant 0 : i32
    return %arg0, %arg1, %c0_i32, %c0_i32_0, %c0_i32_1 : i32, i32, i32, i32, i32
  }
}

</mosaic_0001>

<llo_original>
// kernel: tpu_custom_call.1
$region0: #{tpu_custom_call.1}
  #allocation0 [shape = 'u32[]', space=smem, size = 0x4, offset = 0x4, fixed_abs, tag = 'smem constant byte address 0x4 - core index']
  #allocation1 [shape = 'u32[144,128]{1,0:T(1,128)}', space=vmem, size = 0x12000, scoped, tag = 'internal scratch']
  #allocation2 [shape = 'bf16[128,4]{1,0:T(16,128)(2,1)}', space=vmem, size = 0x8000, scoped, tag = 'scratch operand']
  %s0 = inlined_call_operand.vmem [shape: bf16[2,18,16,16], index: 0, kind: input, shape index: {}]
  %s1 = inlined_call_operand.vmem [shape: bf16[16,4], index: 1, kind: input, shape index: {}]
  %s2 = inlined_call_operand.vmem [shape: f32[1,4], index: 2, kind: input, shape index: {}]
  %s3 = inlined_call_operand.vmem [shape: f32[1,4], index: 3, kind: input, shape index: {}]
  %s4 = inlined_call_operand.vmem [shape: bf16[4,16,4], index: 4, kind: input, shape index: {}]
  %s5 = inlined_call_operand.vmem [shape: f32[1,8], index: 5, kind: input, shape index: {}]
  %s6 = inlined_call_operand.vmem [shape: f32[1,8], index: 6, kind: input, shape index: {}]
  %s7 = inlined_call_operand.vmem [shape: bf16[8,16], index: 7, kind: input, shape index: {}]
  %s8 = inlined_call_operand.vmem [shape: f32[1,16], index: 8, kind: input, shape index: {}]
  %s9 = inlined_call_operand.vmem [shape: f32[1,16], index: 9, kind: input, shape index: {}]
  %s10 = inlined_call_operand.hbm [shape: bf16[2,16,2,16,16], index: 10, kind: output, shape index: {}]
  %s11 = sld [smem:[#allocation0]]
  $region81: #{tpu_custom_call.1} parent=0
    _
  %s13 = ssub.s32 1, %s11
  %s14 = scalar_select 0, %s13, %s11
  $region1: #{tpu_custom_call.1} parent=0
    #allocation3 [shape = 'u8[65536]{0}', space=vmem, size = 0x10000, scoped, tag = 'output window, operand 0']
    #allocation4 [shape = 's32[2]{0}', space=sflag, size = 0x8, scoped, tag = 'scoped memory for tpu_custom_call.1']
    %15 = vsyncpa [#allocation4], 0
    %s16 = scalar_lea.sflag [#allocation4], 1
    %17 = vsyncpa %s16, 0
    loop: start=0, step=1, limit=10
    $region2: #{tpu_custom_call.1} parent=1 // loop_pre_header
      _
    $region3: #{tpu_custom_call.1} parent=1 // loop_header
      %s19 = sphi 0, %s23
      %p20 = scmp.ge.s32.totalorder %s19, 10
      %s26 = sphi 0, %s38
      %s27 = sphi 0, %s34
      %s28 = sphi 0, %s26
      %s29 = sphi 0, %s27
      %s30 = sphi 0, %s28
      %s31 = sphi 0, %s29
      %s41 = sphi 0, %s43
      %s44 = sphi 0, %s41
      %s45 = sphi 0, %s44
      %s61 = sphi 0, %s45
      %s65 = sphi 0, %s65
      %s67 = sphi 0, %s65
      %s68 = sphi 0, %s67
      %s82 = sphi 0, %s68
      %s86 = sphi 0, %s86
      %s88 = sphi 0, %s86
      %s89 = sphi 0, %s88
      %s103 = sphi 0, %s89
      %s107 = sphi 0, %s107
      %s109 = sphi 0, %s107
      %s110 = sphi 0, %s109
      %s124 = sphi 0, %s110
      %s128 = sphi 0, %s128
      %s130 = sphi 0, %s128
      %s131 = sphi 0, %s130
      %s145 = sphi 0, %s131
      %s149 = sphi 0, %s149
      %s151 = sphi 0, %s149
      %s152 = sphi 0, %s151
      %s166 = sphi 0, %s152
      %s170 = sphi 0, %s170
      %s172 = sphi 0, %s170
      %s173 = sphi 0, %s172
      %s187 = sphi 0, %s173
      %s191 = sphi 0, %s191
      %s193 = sphi 0, %s191
      %s194 = sphi 0, %s193
      %s208 = sphi 0, %s194
      %s212 = sphi 0, %s212
      %s214 = sphi 0, %s212
      %s215 = sphi 0, %s214
      %s229 = sphi 0, %s215
      %s233 = sphi 0, %s233
      %s235 = sphi 0, %s233
      %s236 = sphi 0, %s235
      %s250 = sphi 0, %s236
      %s258 = sphi 0, %s260
      %s261 = sphi 0, %s258
      %s262 = sphi 0, %s261
      %s278 = sphi 0, %s262
    $region4: #{tpu_custom_call.1} parent=1 // loop_header_branch
      %22 = sbr.rel (%p20) target = $region8
    $region5: #{tpu_custom_call.1} parent=1 // loop_body
      %s24 = ssub.s32 %s19, 1
      %s25 = ssub.s32 %s19, 2
      %s32 = sadd.s32 1, %s27
      %p33 = scmp.ge.s32.totalorder %s32, 4
      %s34 = scalar_select %p33, 0, %s32
      %s35 = sadd.s32 1, %s26
      %s36 = scalar_select %p33, %s35, %s26
      %p37 = scmp.ge.s32.totalorder %s36, 2
      %s38 = scalar_select %p37, 0, %s36
      %s39 = ssub.s32 %s26, %s38
      %p40 = scmp.eq.s32.totalorder %s39, 0
      %s42 = sadd.s32 %s41, 1
      %s43 = scalar_select %p40, %s41, %s42
      %p46 = pneg %p40
      %p47 = scmp.eq.s32.totalorder %s19, 7
      %p48 = por %p46, %p47
      %p49 = scmp.ne.s32.totalorder %s41, %s44
      %p50 = scmp.eq.s32.totalorder %s19, 0
      %p51 = por %p49, %p50
      %p52 = scmp.ne.s32.totalorder %s41, %s44
      %p53 = scmp.eq.s32.totalorder %s24, 7
      %p54 = por %p52, %p53
      %p55 = scmp.ne.s32.totalorder %s44, %s45
      %p56 = scmp.eq.s32.totalorder %s24, 0
      %p57 = por %p55, %p56
      %p58 = scmp.ne.s32.totalorder %s44, %s45
      %p59 = scmp.eq.s32.totalorder %s25, 7
      %p60 = por %p58, %p59
      %p62 = scmp.ne.s32.totalorder %s45, %s61
      %p63 = scmp.eq.s32.totalorder %s25, 0
      %p64 = por %p62, %p63
      %s66 = sadd.s32 %s65, 1
      %p69 = scmp.eq.s32.totalorder %s19, 7
      %p70 = scmp.ne.s32.totalorder %s65, %s67
      %p71 = scmp.eq.s32.totalorder %s19, 0
      %p72 = por %p70, %p71
      %p73 = scmp.ne.s32.totalorder %s65, %s67
      %p74 = scmp.eq.s32.totalorder %s24, 7
      %p75 = por %p73, %p74
      %p76 = scmp.ne.s32.totalorder %s67, %s68
      %p77 = scmp.eq.s32.totalorder %s24, 0
      %p78 = por %p76, %p77
      %p79 = scmp.ne.s32.totalorder %s67, %s68
      %p80 = scmp.eq.s32.totalorder %s25, 7
      %p81 = por %p79, %p80
      %p83 = scmp.ne.s32.totalorder %s68, %s82
      %p84 = scmp.eq.s32.totalorder %s25, 0
      %p85 = por %p83, %p84
      %s87 = sadd.s32 %s86, 1
      %p90 = scmp.eq.s32.totalorder %s19, 7
      %p91 = scmp.ne.s32.totalorder %s86, %s88
      %p92 = scmp.eq.s32.totalorder %s19, 0
      %p93 = por %p91, %p92
      %p94 = scmp.ne.s32.totalorder %s86, %s88
      %p95 = scmp.eq.s32.totalorder %s24, 7
      %p96 = por %p94, %p95
      %p97 = scmp.ne.s32.totalorder %s88, %s89
      %p98 = scmp.eq.s32.totalorder %s24, 0
      %p99 = por %p97, %p98
      %p100 = scmp.ne.s32.totalorder %s88, %s89
      %p101 = scmp.eq.s32.totalorder %s25, 7
      %p102 = por %p100, %p101
      %p104 = scmp.ne.s32.totalorder %s89, %s103
      %p105 = scmp.eq.s32.totalorder %s25, 0
      %p106 = por %p104, %p105
      %s108 = sadd.s32 %s107, 1
      %p111 = scmp.eq.s32.totalorder %s19, 7
      %p112 = scmp.ne.s32.totalorder %s107, %s109
      %p113 = scmp.eq.s32.totalorder %s19, 0
      %p114 = por %p112, %p113
      %p115 = scmp.ne.s32.totalorder %s107, %s109
      %p116 = scmp.eq.s32.totalorder %s24, 7
      %p117 = por %p115, %p116
      %p118 = scmp.ne.s32.totalorder %s109, %s110
      %p119 = scmp.eq.s32.totalorder %s24, 0
      %p120 = por %p118, %p119
      %p121 = scmp.ne.s32.totalorder %s109, %s110
      %p122 = scmp.eq.s32.totalorder %s25, 7
      %p123 = por %p121, %p122
      %p125 = scmp.ne.s32.totalorder %s110, %s124
      %p126 = scmp.eq.s32.totalorder %s25, 0
      %p127 = por %p125, %p126
      %s129 = sadd.s32 %s128, 1
      %p132 = scmp.eq.s32.totalorder %s19, 7
      %p133 = scmp.ne.s32.totalorder %s128, %s130
      %p134 = scmp.eq.s32.totalorder %s19, 0
      %p135 = por %p133, %p134
      %p136 = scmp.ne.s32.totalorder %s128, %s130
      %p137 = scmp.eq.s32.totalorder %s24, 7
      %p138 = por %p136, %p137
      %p139 = scmp.ne.s32.totalorder %s130, %s131
      %p140 = scmp.eq.s32.totalorder %s24, 0
      %p141 = por %p139, %p140
      %p142 = scmp.ne.s32.totalorder %s130, %s131
      %p143 = scmp.eq.s32.totalorder %s25, 7
      %p144 = por %p142, %p143
      %p146 = scmp.ne.s32.totalorder %s131, %s145
      %p147 = scmp.eq.s32.totalorder %s25, 0
      %p148 = por %p146, %p147
      %s150 = sadd.s32 %s149, 1
      %p153 = scmp.eq.s32.totalorder %s19, 7
      %p154 = scmp.ne.s32.totalorder %s149, %s151
      %p155 = scmp.eq.s32.totalorder %s19, 0
      %p156 = por %p154, %p155
      %p157 = scmp.ne.s32.totalorder %s149, %s151
      %p158 = scmp.eq.s32.totalorder %s24, 7
      %p159 = por %p157, %p158
      %p160 = scmp.ne.s32.totalorder %s151, %s152
      %p161 = scmp.eq.s32.totalorder %s24, 0
      %p162 = por %p160, %p161
      %p163 = scmp.ne.s32.totalorder %s151, %s152
      %p164 = scmp.eq.s32.totalorder %s25, 7
      %p165 = por %p163, %p164
      %p167 = scmp.ne.s32.totalorder %s152, %s166
      %p168 = scmp.eq.s32.totalorder %s25, 0
      %p169 = por %p167, %p168
      %s171 = sadd.s32 %s170, 1
      %p174 = scmp.eq.s32.totalorder %s19, 7
      %p175 = scmp.ne.s32.totalorder %s170, %s172
      %p176 = scmp.eq.s32.totalorder %s19, 0
      %p177 = por %p175, %p176
      %p178 = scmp.ne.s32.totalorder %s170, %s172
      %p179 = scmp.eq.s32.totalorder %s24, 7
      %p180 = por %p178, %p179
      %p181 = scmp.ne.s32.totalorder %s172, %s173
      %p182 = scmp.eq.s32.totalorder %s24, 0
      %p183 = por %p181, %p182
      %p184 = scmp.ne.s32.totalorder %s172, %s173
      %p185 = scmp.eq.s32.totalorder %s25, 7
      %p186 = por %p184, %p185
      %p188 = scmp.ne.s32.totalorder %s173, %s187
      %p189 = scmp.eq.s32.totalorder %s25, 0
      %p190 = por %p188, %p189
      %s192 = sadd.s32 %s191, 1
      %p195 = scmp.eq.s32.totalorder %s19, 7
      %p196 = scmp.ne.s32.totalorder %s191, %s193
      %p197 = scmp.eq.s32.totalorder %s19, 0
      %p198 = por %p196, %p197
      %p199 = scmp.ne.s32.totalorder %s191, %s193
      %p200 = scmp.eq.s32.totalorder %s24, 7
      %p201 = por %p199, %p200
      %p202 = scmp.ne.s32.totalorder %s193, %s194
      %p203 = scmp.eq.s32.totalorder %s24, 0
      %p204 = por %p202, %p203
      %p205 = scmp.ne.s32.totalorder %s193, %s194
      %p206 = scmp.eq.s32.totalorder %s25, 7
      %p207 = por %p205, %p206
      %p209 = scmp.ne.s32.totalorder %s194, %s208
      %p210 = scmp.eq.s32.totalorder %s25, 0
      %p211 = por %p209, %p210
      %s213 = sadd.s32 %s212, 1
      %p216 = scmp.eq.s32.totalorder %s19, 7
      %p217 = scmp.ne.s32.totalorder %s212, %s214
      %p218 = scmp.eq.s32.totalorder %s19, 0
      %p219 = por %p217, %p218
      %p220 = scmp.ne.s32.totalorder %s212, %s214
      %p221 = scmp.eq.s32.totalorder %s24, 7
      %p222 = por %p220, %p221
      %p223 = scmp.ne.s32.totalorder %s214, %s215
      %p224 = scmp.eq.s32.totalorder %s24, 0
      %p225 = por %p223, %p224
      %p226 = scmp.ne.s32.totalorder %s214, %s215
      %p227 = scmp.eq.s32.totalorder %s25, 7
      %p228 = por %p226, %p227
      %p230 = scmp.ne.s32.totalorder %s215, %s229
      %p231 = scmp.eq.s32.totalorder %s25, 0
      %p232 = por %p230, %p231
      %s234 = sadd.s32 %s233, 1
      %p237 = scmp.eq.s32.totalorder %s19, 7
      %p238 = scmp.ne.s32.totalorder %s233, %s235
      %p239 = scmp.eq.s32.totalorder %s19, 0
      %p240 = por %p238, %p239
      %p241 = scmp.ne.s32.totalorder %s233, %s235
      %p242 = scmp.eq.s32.totalorder %s24, 7
      %p243 = por %p241, %p242
      %p244 = scmp.ne.s32.totalorder %s235, %s236
      %p245 = scmp.eq.s32.totalorder %s24, 0
      %p246 = por %p244, %p245
      %p247 = scmp.ne.s32.totalorder %s235, %s236
      %p248 = scmp.eq.s32.totalorder %s25, 7
      %p249 = por %p247, %p248
      %p251 = scmp.ne.s32.totalorder %s236, %s250
      %p252 = scmp.eq.s32.totalorder %s25, 0
      %p253 = por %p251, %p252
      %s254 = ssub.s32 %s26, %s38
      %s255 = ssub.s32 %s27, %s34
      %s256 = sor.u32 %s254, %s255
      %p257 = scmp.eq.s32.totalorder %s256, 0
      %s259 = sadd.s32 %s258, 1
      %s260 = scalar_select %p257, %s258, %s259
      %p263 = pneg %p257
      %p264 = scmp.eq.s32.totalorder %s19, 7
      %p265 = por %p263, %p264
      %p266 = scmp.ne.s32.totalorder %s258, %s261
      %p267 = scmp.eq.s32.totalorder %s19, 0
      %p268 = por %p266, %p267
      %p269 = scmp.ne.s32.totalorder %s258, %s261
      %p270 = scmp.eq.s32.totalorder %s24, 7
      %p271 = por %p269, %p270
      %p272 = scmp.ne.s32.totalorder %s261, %s262
      %p273 = scmp.eq.s32.totalorder %s24, 0
      %p274 = por %p272, %p273
      %p275 = scmp.ne.s32.totalorder %s261, %s262
      %p276 = scmp.eq.s32.totalorder %s25, 7
      %p277 = por %p275, %p276
      %p279 = scmp.ne.s32.totalorder %s262, %s278
      %p280 = scmp.eq.s32.totalorder %s25, 0
      %p281 = por %p279, %p280
      %p282 = scmp.le.s32.totalorder 1, %s19
      %p283 = scmp.lt.s32.totalorder %s19, 9
      %p284 = pnand %p282, %p283
      %p285 = pneg %p284
      // Predicated region
      $region9: #{tpu_custom_call.1} parent=5 // pred_check
        _
      $region10: #{tpu_custom_call.1} parent=5 // pred_check_branch
        %287 = sbr.rel (%p284) target = $region12
      $region11: #{tpu_custom_call.1} parent=5 // pred_region
        %s288 = ssub.s32 %s19, 1
        // Predicated region
        $region13: #{tpu_custom_call.1} parent=11 // pred_check
          %p289 = pneg %p78
        $region14: #{tpu_custom_call.1} parent=11 // pred_check_branch
          %291 = sbr.rel (%p289) target = $region16
        $region15: #{tpu_custom_call.1} parent=11 // pred_region
          _
        $region16: #{tpu_custom_call.1} parent=11 // pred_fallthru
          _
        // Predicated region
        $region17: #{tpu_custom_call.1} parent=11 // pred_check
          %p292 = pneg %p99
        $region18: #{tpu_custom_call.1} parent=11 // pred_check_branch
          %294 = sbr.rel (%p292) target = $region20
        $region19: #{tpu_custom_call.1} parent=11 // pred_region
          _
        $region20: #{tpu_custom_call.1} parent=11 // pred_fallthru
          _
        // Predicated region
        $region21: #{tpu_custom_call.1} parent=11 // pred_check
          %p295 = pneg %p120
        $region22: #{tpu_custom_call.1} parent=11 // pred_check_branch
          %297 = sbr.rel (%p295) target = $region24
        $region23: #{tpu_custom_call.1} parent=11 // pred_region
          _
        $region24: #{tpu_custom_call.1} parent=11 // pred_fallthru
          _
        // Predicated region
        $region25: #{tpu_custom_call.1} parent=11 // pred_check
          %p298 = pneg %p141
        $region26: #{tpu_custom_call.1} parent=11 // pred_check_branch
          %300 = sbr.rel (%p298) target = $region28
        $region27: #{tpu_custom_call.1} parent=11 // pred_region
          _
        $region28: #{tpu_custom_call.1} parent=11 // pred_fallthru
          _
        // Predicated region
        $region29: #{tpu_custom_call.1} parent=11 // pred_check
          %p301 = pneg %p162
        $region30: #{tpu_custom_call.1} parent=11 // pred_check_branch
          %303 = sbr.rel (%p301) target = $region32
        $region31: #{tpu_custom_call.1} parent=11 // pred_region
          _
        $region32: #{tpu_custom_call.1} parent=11 // pred_fallthru
          _
        // Predicated region
        $region33: #{tpu_custom_call.1} parent=11 // pred_check
          %p304 = pneg %p183
        $region34: #{tpu_custom_call.1} parent=11 // pred_check_branch
          %306 = sbr.rel (%p304) target = $region36
        $region35: #{tpu_custom_call.1} parent=11 // pred_region
          _
        $region36: #{tpu_custom_call.1} parent=11 // pred_fallthru
          _
        // Predicated region
        $region37: #{tpu_custom_call.1} parent=11 // pred_check
          %p307 = pneg %p204
        $region38: #{tpu_custom_call.1} parent=11 // pred_check_branch
          %309 = sbr.rel (%p307) target = $region40
        $region39: #{tpu_custom_call.1} parent=11 // pred_region
          _
        $region40: #{tpu_custom_call.1} parent=11 // pred_fallthru
          _
        // Predicated region
        $region41: #{tpu_custom_call.1} parent=11 // pred_check
          %p310 = pneg %p225
        $region42: #{tpu_custom_call.1} parent=11 // pred_check_branch
          %312 = sbr.rel (%p310) target = $region44
        $region43: #{tpu_custom_call.1} parent=11 // pred_region
          _
        $region44: #{tpu_custom_call.1} parent=11 // pred_fallthru
          _
        // Predicated region
        $region45: #{tpu_custom_call.1} parent=11 // pred_check
          %p313 = pneg %p246
        $region46: #{tpu_custom_call.1} parent=11 // pred_check_branch
          %315 = sbr.rel (%p313) target = $region48
        $region47: #{tpu_custom_call.1} parent=11 // pred_region
          _
        $region48: #{tpu_custom_call.1} parent=11 // pred_fallthru
          _
      $region12: #{tpu_custom_call.1} parent=5 // pred_fallthru
        _
      %p316 = scmp.lt.s32.totalorder %s19, 8
      // Predicated region
      $region49: #{tpu_custom_call.1} parent=5 // pred_check
        %p317 = pneg %p316
      $region50: #{tpu_custom_call.1} parent=5 // pred_check_branch
        %319 = sbr.rel (%p317) target = $region52
      $region51: #{tpu_custom_call.1} parent=5 // pred_region
        // Predicated region
        $region53: #{tpu_custom_call.1} parent=51 // pred_check
          %p320 = pneg %p51
        $region54: #{tpu_custom_call.1} parent=51 // pred_check_branch
          %322 = sbr.rel (%p320) target = $region56
        $region55: #{tpu_custom_call.1} parent=51 // pred_region
          %p323 = scmp.lt.s32.totalorder %s26, 1
          %s324 = scalar_select %p323, %s26, 1
          %s325 = smul.addr %s324, 36
          %s326 = smul.addr %s325, 4
          %s327 = scalar_lea.vmem %s0, %s326
        $region56: #{tpu_custom_call.1} parent=51 // pred_fallthru
          _
      $region52: #{tpu_custom_call.1} parent=5 // pred_fallthru
        _
      %p328 = scmp.le.s32.totalorder 1, %s19
      %p329 = scmp.lt.s32.totalorder %s19, 9
      %p330 = pnand %p328, %p329
      %p331 = pneg %p330
      // Predicated region
      $region57: #{tpu_custom_call.1} parent=5 // pred_check
        _
      $region58: #{tpu_custom_call.1} parent=5 // pred_check_branch
        %333 = sbr.rel (%p330) target = $region60
      $region59: #{tpu_custom_call.1} parent=5 // pred_region
        %s334 = ssub.s32 %s19, 1
        %p335 = scmp.lt.s32.totalorder %s28, 1
        %s336 = scalar_select %p335, %s28, 1
        %s337 = smul.addr %s336, 36
        %s338 = smul.addr %s337, 4
        %s339 = scalar_lea.vmem %s0, %s338
        %p340 = pneg %p57
        %p341 = pneg %p54
        %p342 = pneg %p78
        %p343 = pneg %p75
        %p344 = pneg %p99
        %p345 = pneg %p96
        %p346 = pneg %p120
        %p347 = pneg %p117
        %p348 = pneg %p141
        %p349 = pneg %p138
        %p350 = pneg %p162
        %p351 = pneg %p159
        %p352 = pneg %p183
        %p353 = pneg %p180
        %p354 = pneg %p204
        %p355 = pneg %p201
        %p356 = pneg %p225
        %p357 = pneg %p222
        %p358 = pneg %p246
        %p359 = pneg %p243
        %p360 = pneg %p274
        %p361 = pneg %p271
        %s362 = sand.u32 %s261, 1
        %s363 = scalar_lea.sflag [#allocation4], %s362
        %s364 = sand.u32 %s261, 1
        %s365 = smul.addr %s364, 64
        %s366 = scalar_lea.vmem [#allocation3], %s365
        %p367 = scmp.lt.s32.totalorder %s28, 1
        %s368 = scalar_select %p367, %s28, 1
        %s369 = smul.addr %s368, 36
        %s370 = smul.addr %s369, 4
        %s371 = scalar_lea.vmem %s0, %s370
        %s372 = smul.u32 4, %s29
        %s376 = smul.u32 %s29, 4
        %s377 = smul.u32 %s376, 2
        %s378 = smul.addr %s377, 4
        %s379 = scalar_lea.vmem %s371, %s378
        %v380 = vld [vmem:[%s379] sm:$0xf]
        %v381 = vld [vmem:[%s379 + $0x4] sm:$0xf]
        %v382 = vld [vmem:[%s379 + $0x8] sm:$0xf]
        %v383 = vld [vmem:[%s379 + $0xc] sm:$0xf]
        %v384 = vld [vmem:[%s379 + $0x10] sm:$0xf]
        %v385 = vld [vmem:[%s379 + $0x14] sm:$0xf]
        %v386 = vld [vmem:[%s379 + $0x18] sm:$0xf]
        %v387 = vld [vmem:[%s379 + $0x1c] sm:$0xf]
        %v388 = vld [vmem:[%s379 + $0x20] sm:$0xf]
        %v389 = vld [vmem:[%s379 + $0x24] sm:$0xf]
        %v390 = vld [vmem:[%s379 + $0x28] sm:$0xf]
        %v391 = vld [vmem:[%s379 + $0x2c] sm:$0xf]
        %v392 = vld [vmem:[%s1] sm:$0xf]
        %v393 = vld [vmem:[%s1 + $0x4] sm:$0xf]
        %v406 = vunpack.c.l.b16 %v380
        %v407 = vunpack.c.l.b16 %v381
        %v408 = vunpack.c.l.b16 %v382
        %v409 = vunpack.c.l.b16 %v383
        %v410 = vunpack.c.l.b16 %v384
        %v411 = vunpack.c.l.b16 %v385
        %v412 = vunpack.c.l.b16 %v386
        %v413 = vunpack.c.l.b16 %v387
        %v414 = vunpack.c.l.b16 %v388
        %v415 = vunpack.c.l.b16 %v389
        %v416 = vunpack.c.l.b16 %v390
        %v417 = vunpack.c.l.b16 %v391
        %v418 = vpack.c.b16 %v407, %v406
        %v419 = vpack.c.b16 %v409, %v408
        %v420 = vpack.c.b16 %v411, %v410
        %v421 = vpack.c.b16 %v413, %v412
        %v422 = vpack.c.b16 %v415, %v414
        %v423 = vpack.c.b16 %v417, %v416
        %v426 = vunpack.c.l.b16 %v392
        %v427 = vunpack.c.l.b16 %v393
        %v428 = vpack.c.b16 %v427, %v426
        %vm430 = vcmask 130048
        %v432 = vsel %vm430, %v418, 0
        %v435 = vsel %vm430, %v419, 0
        %v438 = vsel %vm430, %v420, 0
        %v441 = vsel %vm430, %v421, 0
        %v444 = vsel %vm430, %v422, 0
        %v447 = vsel %vm430, %v423, 0
        %449 = vmatprep.subr.bf16.mxu0 0
        %450 = vmatpush1.bf16.msra.mxu0 %v428
        %451 = vmatprep.subr.bf16.mxu0 0
        %452 = vmatpush1.bf16.msra.mxu0 0
        %453 = vmatprep.subr.bf16.mxu0 0
        %454 = vmatpush1.bf16.msra.mxu0 0
        %455 = vmatprep.subr.bf16.mxu0 0
        %456 = vmatpush1.bf16.msra.mxu0 0
        %457 = vmatprep.subr.bf16.mxu0 0
        %458 = vmatpush1.bf16.msra.mxu0 0
        %459 = vmatprep.subr.bf16.mxu0 0
        %460 = vmatpush1.bf16.msra.mxu0 0
        %461 = vmatprep.subr.bf16.mxu0 0
        %462 = vmatpush1.bf16.msra.mxu0 0
        %463 = vmatprep.subr.bf16.mxu0 0
        %464 = vmatpush1.bf16.msra.mxu0 0
        %465 = vmatprep.subr.bf16.mxu0 0
        %466 = vmatpush1.bf16.msra.mxu0 0
        %467 = vmatprep.subr.bf16.mxu0 0
        %468 = vmatpush1.bf16.msra.mxu0 0
        %469 = vmatprep.subr.bf16.mxu0 0
        %470 = vmatpush1.bf16.msra.mxu0 0
        %471 = vmatprep.subr.bf16.mxu0 0
        %472 = vmatpush1.bf16.msra.mxu0 0
        %473 = vmatprep.subr.bf16.mxu0 0
        %474 = vmatpush1.bf16.msra.mxu0 0
        %475 = vmatprep.subr.bf16.mxu0 0
        %476 = vmatpush1.bf16.msra.mxu0 0
        %477 = vmatprep.subr.bf16.mxu0 0
        %478 = vmatpush1.bf16.msra.mxu0 0
        %479 = vmatprep.subr.bf16.mxu0 0
        %480 = vmatpush1.bf16.msra.mxu0 0
        %481 = vmatprep.mubr.bf16.mxu0 0
        %482 = vmatmul.mubr.bf16.gmra.mrb[0].mxu0 %v432
        %v483 = vpop.f32.mrb[0].mxu0
        %v484 = vadd.f32 0.0, %v483
        %v485 = vpop.f32.mrb[0].mxu0
        %v486 = vpop.f32.mrb[0].mxu0
        %v487 = vadd.f32 0.0, %v486
        %v488 = vpop.f32.mrb[0].mxu0
        %489 = vmatprep.mubr.bf16.mxu0 0
        %490 = vmatmul.mubr.bf16.gmra.mrb[0].mxu0 %v435
        %v491 = vpop.f32.mrb[0].mxu0
        %v492 = vadd.f32 0.0, %v491
        %v493 = vpop.f32.mrb[0].mxu0
        %v494 = vpop.f32.mrb[0].mxu0
        %v495 = vadd.f32 0.0, %v494
        %v496 = vpop.f32.mrb[0].mxu0
        %497 = vmatprep.mubr.bf16.mxu0 0
        %498 = vmatmul.mubr.bf16.gmra.mrb[0].mxu0 %v438
        %v499 = vpop.f32.mrb[0].mxu0
        %v500 = vadd.f32 0.0, %v499
        %v501 = vpop.f32.mrb[0].mxu0
        %v502 = vpop.f32.mrb[0].mxu0
        %v503 = vadd.f32 0.0, %v502
        %v504 = vpop.f32.mrb[0].mxu0
        %505 = vmatprep.mubr.bf16.mxu0 0
        %506 = vmatmul.mubr.bf16.gmra.mrb[0].mxu0 %v441
        %v507 = vpop.f32.mrb[0].mxu0
        %v508 = vadd.f32 0.0, %v507
        %v509 = vpop.f32.mrb[0].mxu0
        %v510 = vpop.f32.mrb[0].mxu0
        %v511 = vadd.f32 0.0, %v510
        %v512 = vpop.f32.mrb[0].mxu0
        %513 = vmatprep.mubr.bf16.mxu0 0
        %514 = vmatmul.mubr.bf16.gmra.mrb[0].mxu0 %v444
        %v515 = vpop.f32.mrb[0].mxu0
        %v516 = vadd.f32 0.0, %v515
        %v517 = vpop.f32.mrb[0].mxu0
        %v518 = vpop.f32.mrb[0].mxu0
        %v519 = vadd.f32 0.0, %v518
        %v520 = vpop.f32.mrb[0].mxu0
        %521 = vmatprep.mubr.bf16.mxu0 0
        %522 = vmatmul.mubr.bf16.gmra.mrb[0].mxu0 %v447
        %v523 = vpop.f32.mrb[0].mxu0
        %v524 = vadd.f32 0.0, %v523
        %v525 = vpop.f32.mrb[0].mxu0
        %v526 = vpop.f32.mrb[0].mxu0
        %v527 = vadd.f32 0.0, %v526
        %v528 = vpop.f32.mrb[0].mxu0
        %529 = vdwg.mxu0
        %v530 = vld [vmem:[%s2] sm:$0x1]
        %v532 = vlaneseq
        %v533 = vshrl.u32 %v532, 7
        %v534 = vsub.s32 0, %v533
        %v535 = vrot.slane %v530, %v534
        %v537 = vmul.f32 %v484, %v535
        %v538 = vmul.f32 %v487, %v535
        %v539 = vmul.f32 %v492, %v535
        %v540 = vmul.f32 %v495, %v535
        %v541 = vmul.f32 %v500, %v535
        %v542 = vmul.f32 %v503, %v535
        %v543 = vmul.f32 %v508, %v535
        %v544 = vmul.f32 %v511, %v535
        %v545 = vmul.f32 %v516, %v535
        %v546 = vmul.f32 %v519, %v535
        %v547 = vmul.f32 %v524, %v535
        %v548 = vmul.f32 %v527, %v535
        %v549 = vld [vmem:[%s3] sm:$0x1]
        %v551 = vlaneseq
        %v552 = vshrl.u32 %v551, 7
        %v553 = vsub.s32 0, %v552
        %v554 = vrot.slane %v549, %v553
        %v556 = vadd.f32 %v537, %v554
        %v557 = vadd.f32 %v538, %v554
        %v558 = vadd.f32 %v539, %v554
        %v559 = vadd.f32 %v540, %v554
        %v560 = vadd.f32 %v541, %v554
        %v561 = vadd.f32 %v542, %v554
        %v562 = vadd.f32 %v543, %v554
        %v563 = vadd.f32 %v544, %v554
        %v564 = vadd.f32 %v545, %v554
        %v565 = vadd.f32 %v546, %v554
        %v566 = vadd.f32 %v547, %v554
        %v567 = vadd.f32 %v548, %v554
        %v568 = vmax.f32 %v556, 0.0
        %v569 = vmax.f32 %v557, 0.0
        %v570 = vmax.f32 %v558, 0.0
        %v571 = vmax.f32 %v559, 0.0
        %v572 = vmax.f32 %v560, 0.0
        %v573 = vmax.f32 %v561, 0.0
        %v574 = vmax.f32 %v562, 0.0
        %v575 = vmax.f32 %v563, 0.0
        %v576 = vmax.f32 %v564, 0.0
        %v577 = vmax.f32 %v565, 0.0
        %v578 = vmax.f32 %v566, 0.0
        %v579 = vmax.f32 %v567, 0.0
        %v580 = vpack.c.bf16 %v569, %v568
        %v581 = vpack.c.bf16 %v571, %v570
        %v582 = vpack.c.bf16 %v573, %v572
        %v583 = vpack.c.bf16 %v575, %v574
        %v584 = vpack.c.bf16 %v577, %v576
        %v585 = vpack.c.bf16 %v579, %v578
        %vm586 = vcmask 31744
        %587 = vst.msk [vmem:[#allocation2 + $0x8] sm:$0xff] %vm586, %v580
        %588 = vst.msk [vmem:[#allocation2 + $0x10] sm:$0xff] %vm586, %v581
        %589 = vst.msk [vmem:[#allocation2 + $0x18] sm:$0xff] %vm586, %v582
        %590 = vst.msk [vmem:[#allocation2 + $0x20] sm:$0xff] %vm586, %v583
        %591 = vst.msk [vmem:[#allocation2 + $0x28] sm:$0xff] %vm586, %v584
        %592 = vst.msk [vmem:[#allocation2 + $0x30] sm:$0xff] %vm586, %v585
        %593 = vst.msk [vmem:[#allocation2] sm:$0xff] %vm586, 0
        %594 = vst.msk [vmem:[#allocation2 + $0x38] sm:$0xff] %vm586, 0
        %p595 = scmp.eq.s32.totalorder %s29, 0
        // Predicated region
        $region61: #{tpu_custom_call.1} parent=59 // pred_check
          %p596 = pneg %p595
        $region62: #{tpu_custom_call.1} parent=59 // pred_check_branch
          %598 = sbr.rel (%p596) target = $region64
        $region63: #{tpu_custom_call.1} parent=59 // pred_region
          %599 = vst.msk [vmem:[#allocation2 + $0x8] sm:$0xff] %vm586, 0
        $region64: #{tpu_custom_call.1} parent=59 // pred_fallthru
          _
        %p600 = scmp.eq.s32.totalorder %s29, 3
        // Predicated region
        $region65: #{tpu_custom_call.1} parent=59 // pred_check
          %p601 = pneg %p600
        $region66: #{tpu_custom_call.1} parent=59 // pred_check_branch
          %603 = sbr.rel (%p601) target = $region68
        $region67: #{tpu_custom_call.1} parent=59 // pred_region
          %604 = vst.msk [vmem:[#allocation2 + $0x30] sm:$0xff] %vm586, 0
        $region68: #{tpu_custom_call.1} parent=59 // pred_fallthru
          _
        %v605 = vlaneseq
        %v606 = vshrl.u32 %v605, 7
        %v607 = vadd.s32 %v606, 8
        %v608 = vadd.s32 %v606, 16
        %v609 = vadd.s32 %v606, 24
        %v610 = vadd.s32 %v606, 32
        %v611 = vadd.s32 %v606, 40
        %v612 = vadd.s32 %v606, 48
        %v613 = vadd.s32 %v606, 56
        %vm614 = vcmp.lt.s32.totalorder %v606, 0
        %v615 = vsub.s32 0, %v606
        %v616 = vsel %vm614, %v615, %v606
        %v617 = vshrl.u32 %v616, 4
        %v618 = vand.u32 %v616, 15
        %v619 = vsub.s32 0, %v618
        %v620 = vsel %vm614, %v619, %v618
        %vm621 = vcmp.lt.s32.totalorder %v607, 0
        %v622 = vsub.s32 0, %v607
        %v623 = vsel %vm621, %v622, %v607
        %v624 = vshrl.u32 %v623, 4
        %v625 = vand.u32 %v623, 15
        %v626 = vsub.s32 0, %v625
        %v627 = vsel %vm621, %v626, %v625
        %vm628 = vcmp.lt.s32.totalorder %v608, 0
        %v629 = vsub.s32 0, %v608
        %v630 = vsel %vm628, %v629, %v608
        %v631 = vshrl.u32 %v630, 4
        %v632 = vand.u32 %v630, 15
        %v633 = vsub.s32 0, %v632
        %v634 = vsel %vm628, %v633, %v632
        %vm635 = vcmp.lt.s32.totalorder %v609, 0
        %v636 = vsub.s32 0, %v609
        %v637 = vsel %vm635, %v636, %v609
        %v638 = vshrl.u32 %v637, 4
        %v639 = vand.u32 %v637, 15
        %v640 = vsub.s32 0, %v639
        %v641 = vsel %vm635, %v640, %v639
        %vm642 = vcmp.lt.s32.totalorder %v610, 0
        %v643 = vsub.s32 0, %v610
        %v644 = vsel %vm642, %v643, %v610
        %v645 = vshrl.u32 %v644, 4
        %v646 = vand.u32 %v644, 15
        %v647 = vsub.s32 0, %v646
        %v648 = vsel %vm642, %v647, %v646
        %vm649 = vcmp.lt.s32.totalorder %v611, 0
        %v650 = vsub.s32 0, %v611
        %v651 = vsel %vm649, %v650, %v611
        %v652 = vshrl.u32 %v651, 4
        %v653 = vand.u32 %v651, 15
        %v654 = vsub.s32 0, %v653
        %v655 = vsel %vm649, %v654, %v653
        %vm656 = vcmp.lt.s32.totalorder %v612, 0
        %v657 = vsub.s32 0, %v612
        %v658 = vsel %vm656, %v657, %v612
        %v659 = vshrl.u32 %v658, 4
        %v660 = vand.u32 %v658, 15
        %v661 = vsub.s32 0, %v660
        %v662 = vsel %vm656, %v661, %v660
        %vm663 = vcmp.lt.s32.totalorder %v613, 0
        %v664 = vsub.s32 0, %v613
        %v665 = vsel %vm663, %v664, %v613
        %v666 = vshrl.u32 %v665, 4
        %v667 = vand.u32 %v665, 15
        %v668 = vsub.s32 0, %v667
        %v669 = vsel %vm663, %v668, %v667
        %vm670 = vcmp.ne.s32.totalorder %v620, 0
        %vm671 = vcmp.ne.s32.totalorder %v627, 0
        %vm672 = vcmp.ne.s32.totalorder %v634, 0
        %vm673 = vcmp.ne.s32.totalorder %v641, 0
        %vm674 = vcmp.ne.s32.totalorder %v648, 0
        %vm675 = vcmp.ne.s32.totalorder %v655, 0
        %vm676 = vcmp.ne.s32.totalorder %v662, 0
        %vm677 = vcmp.ne.s32.totalorder %v669, 0
        %vm678 = vcmp.lt.s32.totalorder %v620, 0
        %vm679 = vcmp.lt.s32.totalorder %v627, 0
        %vm680 = vcmp.lt.s32.totalorder %v634, 0
        %vm681 = vcmp.lt.s32.totalorder %v641, 0
        %vm682 = vcmp.lt.s32.totalorder %v648, 0
        %vm683 = vcmp.lt.s32.totalorder %v655, 0
        %vm684 = vcmp.lt.s32.totalorder %v662, 0
        %vm685 = vcmp.lt.s32.totalorder %v669, 0
        %vm686 = vmand %vm678, %vm670
        %vm687 = vmand %vm679, %vm671
        %vm688 = vmand %vm680, %vm672
        %vm689 = vmand %vm681, %vm673
        %vm690 = vmand %vm682, %vm674
        %vm691 = vmand %vm683, %vm675
        %vm692 = vmand %vm684, %vm676
        %vm693 = vmand %vm685, %vm677
        %v694 = vadd.s32 %v620, 16
        %v695 = vadd.s32 %v627, 16
        %v696 = vadd.s32 %v634, 16
        %v697 = vadd.s32 %v641, 16
        %v698 = vadd.s32 %v648, 16
        %v699 = vadd.s32 %v655, 16
        %v700 = vadd.s32 %v662, 16
        %v701 = vadd.s32 %v669, 16
        %v702 = vsel %vm686, %v694, %v620
        %v703 = vsel %vm687, %v695, %v627
        %v704 = vsel %vm688, %v696, %v634
        %v705 = vsel %vm689, %v697, %v641
        %v706 = vsel %vm690, %v698, %v648
        %v707 = vsel %vm691, %v699, %v655
        %v708 = vsel %vm692, %v700, %v662
        %v709 = vsel %vm693, %v701, %v669
        %vm710 = vcmp.eq.s32.totalorder %v702, 0
        %vm711 = vcmp.eq.s32.totalorder %v703, 0
        %vm712 = vcmp.eq.s32.totalorder %v704, 0
        %vm713 = vcmp.eq.s32.totalorder %v705, 0
        %vm714 = vcmp.eq.s32.totalorder %v706, 0
        %vm715 = vcmp.eq.s32.totalorder %v707, 0
        %vm716 = vcmp.eq.s32.totalorder %v708, 0
        %vm717 = vcmp.eq.s32.totalorder %v709, 0
        %vm718 = vcmp.eq.s32.totalorder %v702, 15
        %vm719 = vcmp.eq.s32.totalorder %v703, 15
        %vm720 = vcmp.eq.s32.totalorder %v704, 15
        %vm721 = vcmp.eq.s32.totalorder %v705, 15
        %vm722 = vcmp.eq.s32.totalorder %v706, 15
        %vm723 = vcmp.eq.s32.totalorder %v707, 15
        %vm724 = vcmp.eq.s32.totalorder %v708, 15
        %vm725 = vcmp.eq.s32.totalorder %v709, 15
        %v726 = vld [vmem:[#allocation2] sm:$0x80]
        %v727 = vld [vmem:[#allocation2 + $0x8] sm:$0xff]
        %v728 = vld [vmem:[#allocation2 + $0x10] sm:$0xff]
        %v729 = vld [vmem:[#allocation2 + $0x18] sm:$0xff]
        %v730 = vld [vmem:[#allocation2 + $0x20] sm:$0xff]
        %v731 = vsel %vm710, 1, 0
        %v732 = vsel %vm711, 1, 0
        %v733 = vsel %vm712, 1, 0
        %v734 = vsel %vm713, 1, 0
        %v735 = vsel %vm714, 1, 0
        %v736 = vsel %vm715, 1, 0
        %v737 = vsel %vm716, 1, 0
        %v738 = vsel %vm717, 1, 0
        %vm739 = vcmp.eq.s32.totalorder %v731, 1
        %vm740 = vcmp.eq.s32.totalorder %v732, 1
        %vm741 = vcmp.eq.s32.totalorder %v733, 1
        %vm742 = vcmp.eq.s32.totalorder %v734, 1
        %vm743 = vcmp.eq.s32.totalorder %v735, 1
        %vm744 = vcmp.eq.s32.totalorder %v736, 1
        %vm745 = vcmp.eq.s32.totalorder %v737, 1
        %vm746 = vcmp.eq.s32.totalorder %v738, 1
        %vm747 = vmpackc.low %vm739, %vm739
        %vm748 = vmpackc.low %vm740, %vm740
        %vm749 = vmpackc.low %vm741, %vm741
        %vm750 = vmpackc.low %vm742, %vm742
        %vm751 = vmpackc.low %vm743, %vm743
        %vm752 = vmpackc.low %vm744, %vm744
        %vm753 = vmpackc.low %vm745, %vm745
        %vm754 = vmpackc.low %vm746, %vm746
        %v755 = vsel %vm747, 65537, 0
        %v756 = vsel %vm748, 65537, 0
        %v757 = vsel %vm749, 65537, 0
        %v758 = vsel %vm750, 65537, 0
        %v759 = vsel %vm751, 65537, 0
        %v760 = vsel %vm752, 65537, 0
        %v761 = vsel %vm753, 65537, 0
        %v762 = vsel %vm754, 65537, 0
        %v763 = vunpack.c.l.b16 %v755
        %v764 = vunpack.c.l.b16 %v756
        %v765 = vunpack.c.l.b16 %v757
        %v766 = vunpack.c.l.b16 %v758
        %v767 = vunpack.c.l.b16 %v759
        %v768 = vunpack.c.l.b16 %v760
        %v769 = vunpack.c.l.b16 %v761
        %v770 = vunpack.c.l.b16 %v762
        %v771 = vpack.c.b16 %v764, %v763
        %v772 = vpack.c.b16 %v766, %v765
        %v773 = vpack.c.b16 %v768, %v767
        %v774 = vpack.c.b16 %v770, %v769
        %vm775 = vsmask.f32 7424
        %v777 = vshll.u32 %v771, 16
        %v779 = vrot.slane %v777, 1
        %v780 = vshrl.u32 %v771, 16
        %v782 = vor.u32 %v780, %v779
        %v784 = vshll.u32 %v772, 16
        %v786 = vrot.slane %v784, 1
        %v787 = vsel %vm775, %v782, %v786
        %v788 = vshrl.u32 %v772, 16
        %v790 = vor.u32 %v788, %v786
        %v792 = vshll.u32 %v773, 16
        %v794 = vrot.slane %v792, 1
        %v795 = vsel %vm775, %v790, %v794
        %v796 = vshrl.u32 %v773, 16
        %v798 = vor.u32 %v796, %v794
        %v800 = vshll.u32 %v774, 16
        %v802 = vrot.slane %v800, 1
        %v803 = vsel %vm775, %v798, %v802
        %v804 = vshrl.u32 %v774, 16
        %v806 = vor.u32 %v804, %v802
        %vm807 = vcmp.ne.s16.totalorder %v779, 0
        %vm808 = vcmp.ne.s16.totalorder %v787, 0
        %vm809 = vcmp.ne.s16.totalorder %v795, 0
        %vm810 = vcmp.ne.s16.totalorder %v803, 0
        %vm811 = vcmp.ne.s16.totalorder %v806, 0
        %v812 = vsel %vm807, 0, %v726
        %v813 = vsel %vm808, 0, %v727
        %v814 = vsel %vm809, 0, %v728
        %v815 = vsel %vm810, 0, %v729
        %v816 = vsel %vm811, 0, %v730
        %v817 = vld [vmem:[#allocation2 + $0x8] sm:$0x80]
        %v818 = vld [vmem:[#allocation2 + $0x28] sm:$0xff]
        %v819 = vsel %vm807, 0, %v817
        %v820 = vsel %vm808, 0, %v728
        %v821 = vsel %vm809, 0, %v729
        %v822 = vsel %vm810, 0, %v730
        %v823 = vsel %vm811, 0, %v818
        %v825 = vshll.u32 %v727, 16
        %v827 = vrot.slane %v825, 1
        %v828 = vshrl.u32 %v727, 16
        %v830 = vor.u32 %v828, %v827
        %v832 = vshll.u32 %v728, 16
        %v834 = vrot.slane %v832, 1
        %v835 = vsel %vm775, %v830, %v834
        %v836 = vshrl.u32 %v728, 16
        %v838 = vor.u32 %v836, %v834
        %v840 = vshll.u32 %v729, 16
        %v842 = vrot.slane %v840, 1
        %v843 = vsel %vm775, %v838, %v842
        %v844 = vshrl.u32 %v729, 16
        %v846 = vor.u32 %v844, %v842
        %v848 = vshll.u32 %v730, 16
        %v850 = vrot.slane %v848, 1
        %v851 = vsel %vm775, %v846, %v850
        %v852 = vshrl.u32 %v730, 16
        %v854 = vor.u32 %v852, %v850
        %855 = vrot.lane.b32.xlu0 %v827, 4
        %v856 = vpop.permute.xlu0 %855
        %857 = vrot.lane.b32.xlu0 %v835, 4
        %v858 = vpop.permute.xlu0 %857
        %859 = vrot.lane.b32.xlu0 %v843, 4
        %v860 = vpop.permute.xlu0 %859
        %861 = vrot.lane.b32.xlu0 %v851, 4
        %v862 = vpop.permute.xlu0 %861
        %863 = vrot.lane.b32.xlu0 %v854, 4
        %v864 = vpop.permute.xlu0 %863
        %870 = vrot.lane.b32.xlu0 %v819, 8
        %v871 = vpop.permute.xlu0 %870
        %872 = vrot.lane.b32.xlu0 %v820, 8
        %v873 = vpop.permute.xlu0 %872
        %874 = vrot.lane.b32.xlu0 %v821, 8
        %v875 = vpop.permute.xlu0 %874
        %876 = vrot.lane.b32.xlu0 %v822, 8
        %v877 = vpop.permute.xlu0 %876
        %878 = vrot.lane.b32.xlu0 %v823, 8
        %v879 = vpop.permute.xlu0 %878
        %v881 = vshll.u32 %v818, 16
        %v883 = vrot.slane %v881, 1
        %v884 = vsel %vm775, %v854, %v883
        %v885 = vshrl.u32 %v818, 16
        %v887 = vor.u32 %v885, %v883
        %888 = vrot.lane.b32.xlu0 %v834, 12
        %v889 = vpop.permute.xlu0 %888
        %890 = vrot.lane.b32.xlu0 %v843, 12
        %v891 = vpop.permute.xlu0 %890
        %892 = vrot.lane.b32.xlu0 %v851, 12
        %v893 = vpop.permute.xlu0 %892
        %894 = vrot.lane.b32.xlu0 %v884, 12
        %v895 = vpop.permute.xlu0 %894
        %896 = vrot.lane.b32.xlu0 %v887, 12
        %v897 = vpop.permute.xlu0 %896
        %v900 = vsel %vm586, %v812, %v856
        %v903 = vsel %vm586, %v813, %v858
        %v906 = vsel %vm586, %v814, %v860
        %v909 = vsel %vm586, %v815, %v862
        %v912 = vsel %vm586, %v816, %v864
        %vm913 = vcmask 64512
        %v915 = vsel %vm913, %v900, %v871
        %v917 = vsel %vm913, %v903, %v873
        %v919 = vsel %vm913, %v906, %v875
        %v921 = vsel %vm913, %v909, %v877
        %v923 = vsel %vm913, %v912, %v879
        %vm924 = vcmask 97280
        %v926 = vsel %vm924, %v915, %v889
        %v928 = vsel %vm924, %v917, %v891
        %v930 = vsel %vm924, %v919, %v893
        %v932 = vsel %vm924, %v921, %v895
        %v934 = vsel %vm924, %v923, %v897
        %v935 = vld [vmem:[%s4] sm:$0xf]
        %v936 = vld [vmem:[%s4 + $0x4] sm:$0xf]
        %vm937 = vsmask.f32 256
        %v938 = vshrl.u32 %v926, 16
        %v940 = vrot.slane %v938, 7
        %v941 = vshrl.u32 %v928, 16
        %v943 = vrot.slane %v941, 7
        %v944 = vshll.u32 %v928, 16
        %v946 = vor.u32 %v943, %v944
        %v947 = vsel %vm937, %v940, %v946
        %v948 = vshrl.u32 %v930, 16
        %v950 = vrot.slane %v948, 7
        %v951 = vshll.u32 %v930, 16
        %v953 = vor.u32 %v950, %v951
        %v954 = vsel %vm937, %v943, %v953
        %v955 = vshrl.u32 %v932, 16
        %v957 = vrot.slane %v955, 7
        %v958 = vshll.u32 %v932, 16
        %v960 = vor.u32 %v957, %v958
        %v961 = vsel %vm937, %v950, %v960
        %v962 = vshrl.u32 %v934, 16
        %v964 = vrot.slane %v962, 7
        %v965 = vshll.u32 %v934, 16
        %v967 = vor.u32 %v964, %v965
        %v968 = vsel %vm937, %v957, %v967
        %v971 = vunpack.c.l.b16 %v935
        %v972 = vunpack.c.l.b16 %v936
        %v973 = vpack.c.b16 %v972, %v971
        %v976 = vsel %vm430, %v947, 0
        %v979 = vsel %vm430, %v954, 0
        %v982 = vsel %vm430, %v961, 0
        %v985 = vsel %vm430, %v968, 0
        %987 = vmatprep.subr.bf16.mxu0 0
        %988 = vmatpush1.bf16.msra.mxu0 %v973
        %989 = vmatprep.subr.bf16.mxu0 0
        %990 = vmatpush1.bf16.msra.mxu0 0
        %991 = vmatprep.subr.bf16.mxu0 0
        %992 = vmatpush1.bf16.msra.mxu0 0
        %993 = vmatprep.subr.bf16.mxu0 0
        %994 = vmatpush1.bf16.msra.mxu0 0
        %995 = vmatprep.subr.bf16.mxu0 0
        %996 = vmatpush1.bf16.msra.mxu0 0
        %997 = vmatprep.subr.bf16.mxu0 0
        %998 = vmatpush1.bf16.msra.mxu0 0
        %999 = vmatprep.subr.bf16.mxu0 0
        %1000 = vmatpush1.bf16.msra.mxu0 0
        %1001 = vmatprep.subr.bf16.mxu0 0
        %1002 = vmatpush1.bf16.msra.mxu0 0
        %1003 = vmatprep.subr.bf16.mxu0 0
        %1004 = vmatpush1.bf16.msra.mxu0 0
        %1005 = vmatprep.subr.bf16.mxu0 0
        %1006 = vmatpush1.bf16.msra.mxu0 0
        %1007 = vmatprep.subr.bf16.mxu0 0
        %1008 = vmatpush1.bf16.msra.mxu0 0
        %1009 = vmatprep.subr.bf16.mxu0 0
        %1010 = vmatpush1.bf16.msra.mxu0 0
        %1011 = vmatprep.subr.bf16.mxu0 0
        %1012 = vmatpush1.bf16.msra.mxu0 0
        %1013 = vmatprep.subr.bf16.mxu0 0
        %1014 = vmatpush1.bf16.msra.mxu0 0
        %1015 = vmatprep.subr.bf16.mxu0 0
        %1016 = vmatpush1.bf16.msra.mxu0 0
        %1017 = vmatprep.subr.bf16.mxu0 0
        %1018 = vmatpush1.bf16.msra.mxu0 0
        %1019 = vmatprep.mubr.bf16.mxu0 0
        %1020 = vmatmul.mubr.bf16.gmra.mrb[0].mxu0 %v976
        %v1021 = vpop.f32.mrb[0].mxu0
        %v1022 = vadd.f32 0.0, %v1021
        %v1023 = vpop.f32.mrb[0].mxu0
        %v1024 = vpop.f32.mrb[0].mxu0
        %v1025 = vadd.f32 0.0, %v1024
        %v1026 = vpop.f32.mrb[0].mxu0
        %1027 = vmatprep.mubr.bf16.mxu0 0
        %1028 = vmatmul.mubr.bf16.gmra.mrb[0].mxu0 %v979
        %v1029 = vpop.f32.mrb[0].mxu0
        %v1030 = vadd.f32 0.0, %v1029
        %v1031 = vpop.f32.mrb[0].mxu0
        %v1032 = vpop.f32.mrb[0].mxu0
        %v1033 = vadd.f32 0.0, %v1032
        %v1034 = vpop.f32.mrb[0].mxu0
        %1035 = vmatprep.mubr.bf16.mxu0 0
        %1036 = vmatmul.mubr.bf16.gmra.mrb[0].mxu0 %v982
        %v1037 = vpop.f32.mrb[0].mxu0
        %v1038 = vadd.f32 0.0, %v1037
        %v1039 = vpop.f32.mrb[0].mxu0
        %v1040 = vpop.f32.mrb[0].mxu0
        %v1041 = vadd.f32 0.0, %v1040
        %v1042 = vpop.f32.mrb[0].mxu0
        %1043 = vmatprep.mubr.bf16.mxu0 0
        %1044 = vmatmul.mubr.bf16.gmra.mrb[0].mxu0 %v985
        %v1045 = vpop.f32.mrb[0].mxu0
        %v1046 = vadd.f32 0.0, %v1045
        %v1047 = vpop.f32.mrb[0].mxu0
        %v1048 = vpop.f32.mrb[0].mxu0
        %v1049 = vadd.f32 0.0, %v1048
        %v1050 = vpop.f32.mrb[0].mxu0
        %1051 = vdwg.mxu0
        %v1052 = vld [vmem:[#allocation2 + $0x8] sm:$0xff]
        %v1053 = vld [vmem:[#allocation2 + $0x28] sm:$0x1]
        %v1054 = vsel %vm718, 1, 0
        %v1055 = vsel %vm719, 1, 0
        %v1056 = vsel %vm720, 1, 0
        %v1057 = vsel %vm721, 1, 0
        %v1058 = vsel %vm722, 1, 0
        %v1059 = vsel %vm723, 1, 0
        %v1060 = vsel %vm724, 1, 0
        %v1061 = vsel %vm725, 1, 0
        %vm1062 = vcmp.eq.s32.totalorder %v1054, 1
        %vm1063 = vcmp.eq.s32.totalorder %v1055, 1
        %vm1064 = vcmp.eq.s32.totalorder %v1056, 1
        %vm1065 = vcmp.eq.s32.totalorder %v1057, 1
        %vm1066 = vcmp.eq.s32.totalorder %v1058, 1
        %vm1067 = vcmp.eq.s32.totalorder %v1059, 1
        %vm1068 = vcmp.eq.s32.totalorder %v1060, 1
        %vm1069 = vcmp.eq.s32.totalorder %v1061, 1
        %vm1070 = vmpackc.low %vm1062, %vm1062
        %vm1071 = vmpackc.low %vm1063, %vm1063
        %vm1072 = vmpackc.low %vm1064, %vm1064
        %vm1073 = vmpackc.low %vm1065, %vm1065
        %vm1074 = vmpackc.low %vm1066, %vm1066
        %vm1075 = vmpackc.low %vm1067, %vm1067
        %vm1076 = vmpackc.low %vm1068, %vm1068
        %vm1077 = vmpackc.low %vm1069, %vm1069
        %v1078 = vsel %vm1070, 65537, 0
        %v1079 = vsel %vm1071, 65537, 0
        %v1080 = vsel %vm1072, 65537, 0
        %v1081 = vsel %vm1073, 65537, 0
        %v1082 = vsel %vm1074, 65537, 0
        %v1083 = vsel %vm1075, 65537, 0
        %v1084 = vsel %vm1076, 65537, 0
        %v1085 = vsel %vm1077, 65537, 0
        %v1086 = vunpack.c.l.b16 %v1078
        %v1087 = vunpack.c.l.b16 %v1079
        %v1088 = vunpack.c.l.b16 %v1080
        %v1089 = vunpack.c.l.b16 %v1081
        %v1090 = vunpack.c.l.b16 %v1082
        %v1091 = vunpack.c.l.b16 %v1083
        %v1092 = vunpack.c.l.b16 %v1084
        %v1093 = vunpack.c.l.b16 %v1085
        %v1094 = vpack.c.b16 %v1087, %v1086
        %v1095 = vpack.c.b16 %v1089, %v1088
        %v1096 = vpack.c.b16 %v1091, %v1090
        %v1097 = vpack.c.b16 %v1093, %v1092
        %v1099 = vshrl.u32 %v1094, 16
        %v1101 = vrot.slane %v1099, 7
        %v1102 = vshll.u32 %v1094, 16
        %v1104 = vor.u32 %v1101, %v1102
        %v1106 = vshrl.u32 %v1095, 16
        %v1108 = vrot.slane %v1106, 7
        %v1109 = vshll.u32 %v1095, 16
        %v1111 = vor.u32 %v1108, %v1109
        %v1112 = vsel %vm937, %v1101, %v1111
        %v1114 = vshrl.u32 %v1096, 16
        %v1116 = vrot.slane %v1114, 7
        %v1117 = vshll.u32 %v1096, 16
        %v1119 = vor.u32 %v1116, %v1117
        %v1120 = vsel %vm937, %v1108, %v1119
        %v1122 = vshrl.u32 %v1097, 16
        %v1124 = vrot.slane %v1122, 7
        %v1125 = vshll.u32 %v1097, 16
        %v1127 = vor.u32 %v1124, %v1125
        %v1128 = vsel %vm937, %v1116, %v1127
        %vm1129 = vcmp.ne.s16.totalorder %v1104, 0
        %vm1130 = vcmp.ne.s16.totalorder %v1112, 0
        %vm1131 = vcmp.ne.s16.totalorder %v1120, 0
        %vm1132 = vcmp.ne.s16.totalorder %v1128, 0
        %vm1133 = vcmp.ne.s16.totalorder %v1124, 0
        %v1134 = vsel %vm1129, 0, %v1052
        %v1135 = vsel %vm1130, 0, %v728
        %v1136 = vsel %vm1131, 0, %v729
        %v1137 = vsel %vm1132, 0, %v730
        %v1138 = vsel %vm1133, 0, %v1053
        %v1139 = vld [vmem:[#allocation2 + $0x10] sm:$0xff]
        %v1140 = vld [vmem:[#allocation2 + $0x18] sm:$0xff]
        %v1141 = vld [vmem:[#allocation2 + $0x20] sm:$0xff]
        %v1142 = vld [vmem:[#allocation2 + $0x28] sm:$0xff]
        %v1143 = vld [vmem:[#allocation2 + $0x30] sm:$0x1]
        %v1144 = vsel %vm1129, 0, %v1139
        %v1145 = vsel %vm1130, 0, %v1140
        %v1146 = vsel %vm1131, 0, %v1141
        %v1147 = vsel %vm1132, 0, %v1142
        %v1148 = vsel %vm1133, 0, %v1143
        %v1150 = vshrl.u32 %v1134, 16
        %v1152 = vshll.u32 %v1134, 16
        %v1154 = vrot.slane %v1152, 1
        %v1155 = vor.u32 %v1150, %v1154
        %v1157 = vshll.u32 %v1135, 16
        %v1159 = vrot.slane %v1157, 1
        %v1160 = vsel %vm775, %v1155, %v1159
        %v1161 = vshrl.u32 %v1135, 16
        %v1163 = vor.u32 %v1161, %v1159
        %v1165 = vshll.u32 %v1136, 16
        %v1167 = vrot.slane %v1165, 1
        %v1168 = vsel %vm775, %v1163, %v1167
        %v1169 = vshrl.u32 %v1136, 16
        %v1171 = vor.u32 %v1169, %v1167
        %v1173 = vshll.u32 %v1137, 16
        %v1175 = vrot.slane %v1173, 1
        %v1176 = vsel %vm775, %v1171, %v1175
        %v1177 = vshrl.u32 %v1137, 16
        %v1179 = vor.u32 %v1177, %v1175
        %v1181 = vshll.u32 %v1138, 16
        %v1183 = vrot.slane %v1181, 1
        %v1184 = vsel %vm775, %v1179, %v1183
        %1185 = vrot.lane.b32.xlu0 %v1160, 4
        %v1186 = vpop.permute.xlu0 %1185
        %1187 = vrot.lane.b32.xlu0 %v1168, 4
        %v1188 = vpop.permute.xlu0 %1187
        %1189 = vrot.lane.b32.xlu0 %v1176, 4
        %v1190 = vpop.permute.xlu0 %1189
        %1191 = vrot.lane.b32.xlu0 %v1184, 4
        %v1192 = vpop.permute.xlu0 %1191
        %1197 = vrot.lane.b32.xlu0 %v728, 8
        %v1198 = vpop.permute.xlu0 %1197
        %1199 = vrot.lane.b32.xlu0 %v729, 8
        %v1200 = vpop.permute.xlu0 %1199
        %1201 = vrot.lane.b32.xlu0 %v730, 8
        %v1202 = vpop.permute.xlu0 %1201
        %1203 = vrot.lane.b32.xlu0 %v818, 8
        %v1204 = vpop.permute.xlu0 %1203
        %v1206 = vshrl.u32 %v1144, 16
        %v1208 = vshll.u32 %v1144, 16
        %v1210 = vrot.slane %v1208, 1
        %v1211 = vor.u32 %v1206, %v1210
        %v1213 = vshll.u32 %v1145, 16
        %v1215 = vrot.slane %v1213, 1
        %v1216 = vsel %vm775, %v1211, %v1215
        %v1217 = vshrl.u32 %v1145, 16
        %v1219 = vor.u32 %v1217, %v1215
        %v1221 = vshll.u32 %v1146, 16
        %v1223 = vrot.slane %v1221, 1
        %v1224 = vsel %vm775, %v1219, %v1223
        %v1225 = vshrl.u32 %v1146, 16
        %v1227 = vor.u32 %v1225, %v1223
        %v1229 = vshll.u32 %v1147, 16
        %v1231 = vrot.slane %v1229, 1
        %v1232 = vsel %vm775, %v1227, %v1231
        %v1233 = vshrl.u32 %v1147, 16
        %v1235 = vor.u32 %v1233, %v1231
        %v1237 = vshll.u32 %v1148, 16
        %v1239 = vrot.slane %v1237, 1
        %v1240 = vsel %vm775, %v1235, %v1239
        %1241 = vrot.lane.b32.xlu0 %v1216, 12
        %v1242 = vpop.permute.xlu0 %1241
        %1243 = vrot.lane.b32.xlu0 %v1224, 12
        %v1244 = vpop.permute.xlu0 %1243
        %1245 = vrot.lane.b32.xlu0 %v1232, 12
        %v1246 = vpop.permute.xlu0 %1245
        %1247 = vrot.lane.b32.xlu0 %v1240, 12
        %v1248 = vpop.permute.xlu0 %1247
        %v1250 = vsel %vm586, %v727, %v1186
        %v1252 = vsel %vm586, %v728, %v1188
        %v1254 = vsel %vm586, %v729, %v1190
        %v1256 = vsel %vm586, %v730, %v1192
        %v1258 = vsel %vm913, %v1250, %v1198
        %v1260 = vsel %vm913, %v1252, %v1200
        %v1262 = vsel %vm913, %v1254, %v1202
        %v1264 = vsel %vm913, %v1256, %v1204
        %v1266 = vsel %vm924, %v1258, %v1242
        %v1268 = vsel %vm924, %v1260, %v1244
        %v1270 = vsel %vm924, %v1262, %v1246
        %v1272 = vsel %vm924, %v1264, %v1248
        %s1273 = scalar_lea.vmem %s4, 8
        %v1274 = vld [vmem:[%s1273] sm:$0xf]
        %v1275 = vld [vmem:[%s1273 + $0x4] sm:$0xf]
        %v1278 = vunpack.c.l.b16 %v1274
        %v1279 = vunpack.c.l.b16 %v1275
        %v1280 = vpack.c.b16 %v1279, %v1278
        %v1282 = vsel %vm430, %v1266, 0
        %v1284 = vsel %vm430, %v1268, 0
        %v1286 = vsel %vm430, %v1270, 0
        %v1288 = vsel %vm430, %v1272, 0
        %1290 = vmatprep.subr.bf16.mxu0 0
        %1291 = vmatpush1.bf16.msra.mxu0 %v1280
        %1292 = vmatprep.subr.bf16.mxu0 0
        %1293 = vmatpush1.bf16.msra.mxu0 0
        %1294 = vmatprep.subr.bf16.mxu0 0
        %1295 = vmatpush1.bf16.msra.mxu0 0
        %1296 = vmatprep.subr.bf16.mxu0 0
        %1297 = vmatpush1.bf16.msra.mxu0 0
        %1298 = vmatprep.subr.bf16.mxu0 0
        %1299 = vmatpush1.bf16.msra.mxu0 0
        %1300 = vmatprep.subr.bf16.mxu0 0
        %1301 = vmatpush1.bf16.msra.mxu0 0
        %1302 = vmatprep.subr.bf16.mxu0 0
        %1303 = vmatpush1.bf16.msra.mxu0 0
        %1304 = vmatprep.subr.bf16.mxu0 0
        %1305 = vmatpush1.bf16.msra.mxu0 0
        %1306 = vmatprep.subr.bf16.mxu0 0
        %1307 = vmatpush1.bf16.msra.mxu0 0
        %1308 = vmatprep.subr.bf16.mxu0 0
        %1309 = vmatpush1.bf16.msra.mxu0 0
        %1310 = vmatprep.subr.bf16.mxu0 0
        %1311 = vmatpush1.bf16.msra.mxu0 0
        %1312 = vmatprep.subr.bf16.mxu0 0
        %1313 = vmatpush1.bf16.msra.mxu0 0
        %1314 = vmatprep.subr.bf16.mxu0 0
        %1315 = vmatpush1.bf16.msra.mxu0 0
        %1316 = vmatprep.subr.bf16.mxu0 0
        %1317 = vmatpush1.bf16.msra.mxu0 0
        %1318 = vmatprep.subr.bf16.mxu0 0
        %1319 = vmatpush1.bf16.msra.mxu0 0
        %1320 = vmatprep.subr.bf16.mxu0 0
        %1321 = vmatpush1.bf16.msra.mxu0 0
        %1322 = vmatprep.mubr.bf16.mxu0 0
        %1323 = vmatmul.mubr.bf16.gmra.mrb[0].mxu0 %v1282
        %v1324 = vpop.f32.mrb[0].mxu0
        %v1325 = vadd.f32 0.0, %v1324
        %v1326 = vpop.f32.mrb[0].mxu0
        %v1327 = vpop.f32.mrb[0].mxu0
        %v1328 = vadd.f32 0.0, %v1327
        %v1329 = vpop.f32.mrb[0].mxu0
        %1330 = vmatprep.mubr.bf16.mxu0 0
        %1331 = vmatmul.mubr.bf16.gmra.mrb[0].mxu0 %v1284
        %v1332 = vpop.f32.mrb[0].mxu0
        %v1333 = vadd.f32 0.0, %v1332
        %v1334 = vpop.f32.mrb[0].mxu0
        %v1335 = vpop.f32.mrb[0].mxu0
        %v1336 = vadd.f32 0.0, %v1335
        %v1337 = vpop.f32.mrb[0].mxu0
        %1338 = vmatprep.mubr.bf16.mxu0 0
        %1339 = vmatmul.mubr.bf16.gmra.mrb[0].mxu0 %v1286
        %v1340 = vpop.f32.mrb[0].mxu0
        %v1341 = vadd.f32 0.0, %v1340
        %v1342 = vpop.f32.mrb[0].mxu0
        %v1343 = vpop.f32.mrb[0].mxu0
        %v1344 = vadd.f32 0.0, %v1343
        %v1345 = vpop.f32.mrb[0].mxu0
        %1346 = vmatprep.mubr.bf16.mxu0 0
        %1347 = vmatmul.mubr.bf16.gmra.mrb[0].mxu0 %v1288
        %v1348 = vpop.f32.mrb[0].mxu0
        %v1349 = vadd.f32 0.0, %v1348
        %v1350 = vpop.f32.mrb[0].mxu0
        %v1351 = vpop.f32.mrb[0].mxu0
        %v1352 = vadd.f32 0.0, %v1351
        %v1353 = vpop.f32.mrb[0].mxu0
        %1354 = vdwg.mxu0
        %1363 = vrot.lane.b32.xlu0 %v1325, 4
        %v1364 = vpop.permute.xlu0 %1363
        %1365 = vrot.lane.b32.xlu0 %v1328, 4
        %v1366 = vpop.permute.xlu0 %1365
        %1367 = vrot.lane.b32.xlu0 %v1333, 4
        %v1368 = vpop.permute.xlu0 %1367
        %1369 = vrot.lane.b32.xlu0 %v1336, 4
        %v1370 = vpop.permute.xlu0 %1369
        %1371 = vrot.lane.b32.xlu0 %v1341, 4
        %v1372 = vpop.permute.xlu0 %1371
        %1373 = vrot.lane.b32.xlu0 %v1344, 4
        %v1374 = vpop.permute.xlu0 %1373
        %1375 = vrot.lane.b32.xlu0 %v1349, 4
        %v1376 = vpop.permute.xlu0 %1375
        %1377 = vrot.lane.b32.xlu0 %v1352, 4
        %v1378 = vpop.permute.xlu0 %1377
        %v1387 = vsel %vm586, %v1022, %v1364
        %v1388 = vsel %vm586, %v1025, %v1366
        %v1389 = vsel %vm586, %v1030, %v1368
        %v1390 = vsel %vm586, %v1033, %v1370
        %v1391 = vsel %vm586, %v1038, %v1372
        %v1392 = vsel %vm586, %v1041, %v1374
        %v1393 = vsel %vm586, %v1046, %v1376
        %v1394 = vsel %vm586, %v1049, %v1378
        %v1395 = vld [vmem:[%s5] sm:$0x1]
        %v1397 = vlaneseq
        %v1398 = vshrl.u32 %v1397, 7
        %v1399 = vsub.s32 0, %v1398
        %v1400 = vrot.slane %v1395, %v1399
        %v1402 = vmul.f32 %v1387, %v1400
        %v1403 = vmul.f32 %v1388, %v1400
        %v1404 = vmul.f32 %v1389, %v1400
        %v1405 = vmul.f32 %v1390, %v1400
        %v1406 = vmul.f32 %v1391, %v1400
        %v1407 = vmul.f32 %v1392, %v1400
        %v1408 = vmul.f32 %v1393, %v1400
        %v1409 = vmul.f32 %v1394, %v1400
        %v1410 = vld [vmem:[%s6] sm:$0x1]
        %v1412 = vlaneseq
        %v1413 = vshrl.u32 %v1412, 7
        %v1414 = vsub.s32 0, %v1413
        %v1415 = vrot.slane %v1410, %v1414
        %v1417 = vadd.f32 %v1402, %v1415
        %v1418 = vadd.f32 %v1403, %v1415
        %v1419 = vadd.f32 %v1404, %v1415
        %v1420 = vadd.f32 %v1405, %v1415
        %v1421 = vadd.f32 %v1406, %v1415
        %v1422 = vadd.f32 %v1407, %v1415
        %v1423 = vadd.f32 %v1408, %v1415
        %v1424 = vadd.f32 %v1409, %v1415
        %v1425 = vmax.f32 %v1417, 0.0
        %v1426 = vmax.f32 %v1418, 0.0
        %v1427 = vmax.f32 %v1419, 0.0
        %v1428 = vmax.f32 %v1420, 0.0
        %v1429 = vmax.f32 %v1421, 0.0
        %v1430 = vmax.f32 %v1422, 0.0
        %v1431 = vmax.f32 %v1423, 0.0
        %v1432 = vmax.f32 %v1424, 0.0
        %v1433 = vpack.c.bf16 %v1426, %v1425
        %v1434 = vpack.c.bf16 %v1428, %v1427
        %v1435 = vpack.c.bf16 %v1430, %v1429
        %v1436 = vpack.c.bf16 %v1432, %v1431
        %v1437 = vld [vmem:[%s7] sm:$0xf]
        %v1439 = vsel %vm913, %v1433, 0
        %v1442 = vsel %vm913, %v1434, 0
        %v1445 = vsel %vm913, %v1435, 0
        %v1448 = vsel %vm913, %v1436, 0
        %vm1450 = vcmask 1043456
        %v1452 = vsel %vm1450, %v1437, 0
        %1454 = vmatprep.subr.bf16.mxu0 0
        %1455 = vmatpush1.bf16.msra.mxu0 %v1452
        %1456 = vmatprep.subr.bf16.mxu0 0
        %1457 = vmatpush1.bf16.msra.mxu0 0
        %1458 = vmatprep.subr.bf16.mxu0 0
        %1459 = vmatpush1.bf16.msra.mxu0 0
        %1460 = vmatprep.subr.bf16.mxu0 0
        %1461 = vmatpush1.bf16.msra.mxu0 0
        %1462 = vmatprep.subr.bf16.mxu0 0
        %1463 = vmatpush1.bf16.msra.mxu0 0
        %1464 = vmatprep.subr.bf16.mxu0 0
        %1465 = vmatpush1.bf16.msra.mxu0 0
        %1466 = vmatprep.subr.bf16.mxu0 0
        %1467 = vmatpush1.bf16.msra.mxu0 0
        %1468 = vmatprep.subr.bf16.mxu0 0
        %1469 = vmatpush1.bf16.msra.mxu0 0
        %1470 = vmatprep.subr.bf16.mxu0 0
        %1471 = vmatpush1.bf16.msra.mxu0 0
        %1472 = vmatprep.subr.bf16.mxu0 0
        %1473 = vmatpush1.bf16.msra.mxu0 0
        %1474 = vmatprep.subr.bf16.mxu0 0
        %1475 = vmatpush1.bf16.msra.mxu0 0
        %1476 = vmatprep.subr.bf16.mxu0 0
        %1477 = vmatpush1.bf16.msra.mxu0 0
        %1478 = vmatprep.subr.bf16.mxu0 0
        %1479 = vmatpush1.bf16.msra.mxu0 0
        %1480 = vmatprep.subr.bf16.mxu0 0
        %1481 = vmatpush1.bf16.msra.mxu0 0
        %1482 = vmatprep.subr.bf16.mxu0 0
        %1483 = vmatpush1.bf16.msra.mxu0 0
        %1484 = vmatprep.subr.bf16.mxu0 0
        %1485 = vmatpush1.bf16.msra.mxu0 0
        %1486 = vmatprep.mubr.bf16.mxu0 0
        %1487 = vmatmul.mubr.bf16.gmra.mrb[0].mxu0 %v1439
        %v1488 = vpop.f32.mrb[0].mxu0
        %v1489 = vadd.f32 0.0, %v1488
        %v1490 = vpop.f32.mrb[0].mxu0
        %v1491 = vpop.f32.mrb[0].mxu0
        %v1492 = vadd.f32 0.0, %v1491
        %v1493 = vpop.f32.mrb[0].mxu0
        %1494 = vmatprep.mubr.bf16.mxu0 0
        %1495 = vmatmul.mubr.bf16.gmra.mrb[0].mxu0 %v1442
        %v1496 = vpop.f32.mrb[0].mxu0
        %v1497 = vadd.f32 0.0, %v1496
        %v1498 = vpop.f32.mrb[0].mxu0
        %v1499 = vpop.f32.mrb[0].mxu0
        %v1500 = vadd.f32 0.0, %v1499
        %v1501 = vpop.f32.mrb[0].mxu0
        %1502 = vmatprep.mubr.bf16.mxu0 0
        %1503 = vmatmul.mubr.bf16.gmra.mrb[0].mxu0 %v1445
        %v1504 = vpop.f32.mrb[0].mxu0
        %v1505 = vadd.f32 0.0, %v1504
        %v1506 = vpop.f32.mrb[0].mxu0
        %v1507 = vpop.f32.mrb[0].mxu0
        %v1508 = vadd.f32 0.0, %v1507
        %v1509 = vpop.f32.mrb[0].mxu0
        %1510 = vmatprep.mubr.bf16.mxu0 0
        %1511 = vmatmul.mubr.bf16.gmra.mrb[0].mxu0 %v1448
        %v1512 = vpop.f32.mrb[0].mxu0
        %v1513 = vadd.f32 0.0, %v1512
        %v1514 = vpop.f32.mrb[0].mxu0
        %v1515 = vpop.f32.mrb[0].mxu0
        %v1516 = vadd.f32 0.0, %v1515
        %v1517 = vpop.f32.mrb[0].mxu0
        %1518 = vdwg.mxu0
        %v1519 = vld [vmem:[%s8] sm:$0x1]
        %v1521 = vlaneseq
        %v1522 = vshrl.u32 %v1521, 7
        %v1523 = vsub.s32 0, %v1522
        %v1524 = vrot.slane %v1519, %v1523
        %v1526 = vmul.f32 %v1489, %v1524
        %v1527 = vmul.f32 %v1492, %v1524
        %v1528 = vmul.f32 %v1497, %v1524
        %v1529 = vmul.f32 %v1500, %v1524
        %v1530 = vmul.f32 %v1505, %v1524
        %v1531 = vmul.f32 %v1508, %v1524
        %v1532 = vmul.f32 %v1513, %v1524
        %v1533 = vmul.f32 %v1516, %v1524
        %v1534 = vld [vmem:[%s9] sm:$0x1]
        %v1536 = vlaneseq
        %v1537 = vshrl.u32 %v1536, 7
        %v1538 = vsub.s32 0, %v1537
        %v1539 = vrot.slane %v1534, %v1538
        %v1541 = vadd.f32 %v1526, %v1539
        %v1542 = vadd.f32 %v1527, %v1539
        %v1543 = vadd.f32 %v1528, %v1539
        %v1544 = vadd.f32 %v1529, %v1539
        %v1545 = vadd.f32 %v1530, %v1539
        %v1546 = vadd.f32 %v1531, %v1539
        %v1547 = vadd.f32 %v1532, %v1539
        %v1548 = vadd.f32 %v1533, %v1539
        %v1549 = vmax.f32 %v1541, 0.0
        %v1550 = vmax.f32 %v1542, 0.0
        %v1551 = vmax.f32 %v1543, 0.0
        %v1552 = vmax.f32 %v1544, 0.0
        %v1553 = vmax.f32 %v1545, 0.0
        %v1554 = vmax.f32 %v1546, 0.0
        %v1555 = vmax.f32 %v1547, 0.0
        %v1556 = vmax.f32 %v1548, 0.0
        %v1557 = vpack.c.bf16 %v1550, %v1549
        %v1558 = vpack.c.bf16 %v1552, %v1551
        %v1559 = vpack.c.bf16 %v1554, %v1553
        %v1560 = vpack.c.bf16 %v1556, %v1555
        %v1565 = vunpack.c.l.b16 %v1557
        %v1566 = vunpack.c.h.b16 %v1557
        %v1567 = vunpack.c.l.b16 %v1558
        %v1568 = vunpack.c.h.b16 %v1558
        %v1569 = vunpack.c.l.b16 %v1559
        %v1570 = vunpack.c.h.b16 %v1559
        %v1571 = vunpack.c.l.b16 %v1560
        %v1572 = vunpack.c.h.b16 %v1560
        %v1573 = vpack.c.b16 %v1565, %v1565
        %v1574 = vpack.c.b16 %v1566, %v1566
        %v1575 = vpack.c.b16 %v1567, %v1567
        %v1576 = vpack.c.b16 %v1568, %v1568
        %v1577 = vpack.c.b16 %v1569, %v1569
        %v1578 = vpack.c.b16 %v1570, %v1570
        %v1579 = vpack.c.b16 %v1571, %v1571
        %v1580 = vpack.c.b16 %v1572, %v1572
        %vm1589 = vcmask 125952
        %1590 = vst.msk [vmem:[%s366] sm:$0xf] %vm1589, %v1573
        %1591 = vst.msk [vmem:[%s366 + $0x4] sm:$0xf] %vm1589, %v1574
        %1592 = vst.msk [vmem:[%s366 + $0x10] sm:$0xf] %vm1589, %v1575
        %1593 = vst.msk [vmem:[%s366 + $0x14] sm:$0xf] %vm1589, %v1576
        %1594 = vst.msk [vmem:[%s366 + $0x20] sm:$0xf] %vm1589, %v1577
        %1595 = vst.msk [vmem:[%s366 + $0x24] sm:$0xf] %vm1589, %v1578
        %1596 = vst.msk [vmem:[%s366 + $0x30] sm:$0xf] %vm1589, %v1579
        %1597 = vst.msk [vmem:[%s366 + $0x34] sm:$0xf] %vm1589, %v1580
        %v1598 = vld [vmem:[#allocation2 + $0x10] sm:$0x80]
        %v1599 = vld [vmem:[#allocation2 + $0x18] sm:$0xff]
        %v1600 = vld [vmem:[#allocation2 + $0x20] sm:$0xff]
        %v1601 = vld [vmem:[#allocation2 + $0x28] sm:$0xff]
        %v1602 = vld [vmem:[#allocation2 + $0x30] sm:$0xff]
        %v1603 = vsel %vm807, 0, %v1598
        %v1604 = vsel %vm808, 0, %v1599
        %v1605 = vsel %vm809, 0, %v1600
        %v1606 = vsel %vm810, 0, %v1601
        %v1607 = vsel %vm811, 0, %v1602
        %1608 = vrot.lane.b32.xlu0 %v834, 4
        %v1609 = vpop.permute.xlu0 %1608
        %1610 = vrot.lane.b32.xlu0 %v884, 4
        %v1611 = vpop.permute.xlu0 %1610
        %1612 = vrot.lane.b32.xlu0 %v887, 4
        %v1613 = vpop.permute.xlu0 %1612
        %1619 = vrot.lane.b32.xlu0 %v1603, 8
        %v1620 = vpop.permute.xlu0 %1619
        %1621 = vrot.lane.b32.xlu0 %v1604, 8
        %v1622 = vpop.permute.xlu0 %1621
        %1623 = vrot.lane.b32.xlu0 %v1605, 8
        %v1624 = vpop.permute.xlu0 %1623
        %1625 = vrot.lane.b32.xlu0 %v1606, 8
        %v1626 = vpop.permute.xlu0 %1625
        %1627 = vrot.lane.b32.xlu0 %v1607, 8
        %v1628 = vpop.permute.xlu0 %1627
        %v1630 = vshll.u32 %v1599, 16
        %v1632 = vrot.slane %v1630, 1
        %v1633 = vshrl.u32 %v1599, 16
        %v1635 = vor.u32 %v1633, %v1632
        %v1637 = vshll.u32 %v1600, 16
        %v1639 = vrot.slane %v1637, 1
        %v1640 = vsel %vm775, %v1635, %v1639
        %v1641 = vshrl.u32 %v1600, 16
        %v1643 = vor.u32 %v1641, %v1639
        %v1645 = vshll.u32 %v1601, 16
        %v1647 = vrot.slane %v1645, 1
        %v1648 = vsel %vm775, %v1643, %v1647
        %v1649 = vshrl.u32 %v1601, 16
        %v1651 = vor.u32 %v1649, %v1647
        %v1653 = vshll.u32 %v1602, 16
        %v1655 = vrot.slane %v1653, 1
        %v1656 = vsel %vm775, %v1651, %v1655
        %v1657 = vshrl.u32 %v1602, 16
        %v1659 = vor.u32 %v1657, %v1655
        %1660 = vrot.lane.b32.xlu0 %v1632, 12
        %v1661 = vpop.permute.xlu0 %1660
        %1662 = vrot.lane.b32.xlu0 %v1640, 12
        %v1663 = vpop.permute.xlu0 %1662
        %1664 = vrot.lane.b32.xlu0 %v1648, 12
        %v1665 = vpop.permute.xlu0 %1664
        %1666 = vrot.lane.b32.xlu0 %v1656, 12
        %v1667 = vpop.permute.xlu0 %1666
        %1668 = vrot.lane.b32.xlu0 %v1659, 12
        %v1669 = vpop.permute.xlu0 %1668
        %v1672 = vsel %vm586, %v819, %v1609
        %v1674 = vsel %vm586, %v820, %v860
        %v1676 = vsel %vm586, %v821, %v862
        %v1679 = vsel %vm586, %v822, %v1611
        %v1682 = vsel %vm586, %v823, %v1613
        %v1684 = vsel %vm913, %v1672, %v1620
        %v1686 = vsel %vm913, %v1674, %v1622
        %v1688 = vsel %vm913, %v1676, %v1624
        %v1690 = vsel %vm913, %v1679, %v1626
        %v1692 = vsel %vm913, %v1682, %v1628
        %v1694 = vsel %vm924, %v1684, %v1661
        %v1696 = vsel %vm924, %v1686, %v1663
        %v1698 = vsel %vm924, %v1688, %v1665
        %v1700 = vsel %vm924, %v1690, %v1667
        %v1702 = vsel %vm924, %v1692, %v1669
        %s1703 = scalar_lea.vmem %s4, 16
        %v1704 = vld [vmem:[%s1703] sm:$0xf]
        %v1705 = vld [vmem:[%s1703 + $0x4] sm:$0xf]
        %v1706 = vshrl.u32 %v1694, 16
        %v1708 = vrot.slane %v1706, 7
        %v1709 = vshrl.u32 %v1696, 16
        %v1711 = vrot.slane %v1709, 7
        %v1712 = vshll.u32 %v1696, 16
        %v1714 = vor.u32 %v1711, %v1712
        %v1715 = vsel %vm937, %v1708, %v1714
        %v1716 = vshrl.u32 %v1698, 16
        %v1718 = vrot.slane %v1716, 7
        %v1719 = vshll.u32 %v1698, 16
        %v1721 = vor.u32 %v1718, %v1719
        %v1722 = vsel %vm937, %v1711, %v1721
        %v1723 = vshrl.u32 %v1700, 16
        %v1725 = vrot.slane %v1723, 7
        %v1726 = vshll.u32 %v1700, 16
        %v1728 = vor.u32 %v1725, %v1726
        %v1729 = vsel %vm937, %v1718, %v1728
        %v1730 = vshrl.u32 %v1702, 16
        %v1732 = vrot.slane %v1730, 7
        %v1733 = vshll.u32 %v1702, 16
        %v1735 = vor.u32 %v1732, %v1733
        %v1736 = vsel %vm937, %v1725, %v1735
        %v1739 = vunpack.c.l.b16 %v1704
        %v1740 = vunpack.c.l.b16 %v1705
        %v1741 = vpack.c.b16 %v1740, %v1739
        %v1744 = vsel %vm430, %v1715, 0
        %v1747 = vsel %vm430, %v1722, 0
        %v1750 = vsel %vm430, %v1729, 0
        %v1753 = vsel %vm430, %v1736, 0
        %1755 = vmatprep.subr.bf16.mxu0 0
        %1756 = vmatpush1.bf16.msra.mxu0 %v1741
        %1757 = vmatprep.subr.bf16.mxu0 0
        %1758 = vmatpush1.bf16.msra.mxu0 0
        %1759 = vmatprep.subr.bf16.mxu0 0
        %1760 = vmatpush1.bf16.msra.mxu0 0
        %1761 = vmatprep.subr.bf16.mxu0 0
        %1762 = vmatpush1.bf16.msra.mxu0 0
        %1763 = vmatprep.subr.bf16.mxu0 0
        %1764 = vmatpush1.bf16.msra.mxu0 0
        %1765 = vmatprep.subr.bf16.mxu0 0
        %1766 = vmatpush1.bf16.msra.mxu0 0
        %1767 = vmatprep.subr.bf16.mxu0 0
        %1768 = vmatpush1.bf16.msra.mxu0 0
        %1769 = vmatprep.subr.bf16.mxu0 0
        %1770 = vmatpush1.bf16.msra.mxu0 0
        %1771 = vmatprep.subr.bf16.mxu0 0
        %1772 = vmatpush1.bf16.msra.mxu0 0
        %1773 = vmatprep.subr.bf16.mxu0 0
        %1774 = vmatpush1.bf16.msra.mxu0 0
        %1775 = vmatprep.subr.bf16.mxu0 0
        %1776 = vmatpush1.bf16.msra.mxu0 0
        %1777 = vmatprep.subr.bf16.mxu0 0
        %1778 = vmatpush1.bf16.msra.mxu0 0
        %1779 = vmatprep.subr.bf16.mxu0 0
        %1780 = vmatpush1.bf16.msra.mxu0 0
        %1781 = vmatprep.subr.bf16.mxu0 0
        %1782 = vmatpush1.bf16.msra.mxu0 0
        %1783 = vmatprep.subr.bf16.mxu0 0
        %1784 = vmatpush1.bf16.msra.mxu0 0
        %1785 = vmatprep.subr.bf16.mxu0 0
        %1786 = vmatpush1.bf16.msra.mxu0 0
        %1787 = vmatprep.mubr.bf16.mxu0 0
        %1788 = vmatmul.mubr.bf16.gmra.mrb[0].mxu0 %v1744
        %v1789 = vpop.f32.mrb[0].mxu0
        %v1790 = vadd.f32 0.0, %v1789
        %v1791 = vpop.f32.mrb[0].mxu0
        %v1792 = vpop.f32.mrb[0].mxu0
        %v1793 = vadd.f32 0.0, %v1792
        %v1794 = vpop.f32.mrb[0].mxu0
        %1795 = vmatprep.mubr.bf16.mxu0 0
        %1796 = vmatmul.mubr.bf16.gmra.mrb[0].mxu0 %v1747
        %v1797 = vpop.f32.mrb[0].mxu0
        %v1798 = vadd.f32 0.0, %v1797
        %v1799 = vpop.f32.mrb[0].mxu0
        %v1800 = vpop.f32.mrb[0].mxu0
        %v1801 = vadd.f32 0.0, %v1800
        %v1802 = vpop.f32.mrb[0].mxu0
        %1803 = vmatprep.mubr.bf16.mxu0 0
        %1804 = vmatmul.mubr.bf16.gmra.mrb[0].mxu0 %v1750
        %v1805 = vpop.f32.mrb[0].mxu0
        %v1806 = vadd.f32 0.0, %v1805
        %v1807 = vpop.f32.mrb[0].mxu0
        %v1808 = vpop.f32.mrb[0].mxu0
        %v1809 = vadd.f32 0.0, %v1808
        %v1810 = vpop.f32.mrb[0].mxu0
        %1811 = vmatprep.mubr.bf16.mxu0 0
        %1812 = vmatmul.mubr.bf16.gmra.mrb[0].mxu0 %v1753
        %v1813 = vpop.f32.mrb[0].mxu0
        %v1814 = vadd.f32 0.0, %v1813
        %v1815 = vpop.f32.mrb[0].mxu0
        %v1816 = vpop.f32.mrb[0].mxu0
        %v1817 = vadd.f32 0.0, %v1816
        %v1818 = vpop.f32.mrb[0].mxu0
        %1819 = vdwg.mxu0
        %v1820 = vld [vmem:[#allocation2 + $0x18] sm:$0xff]
        %v1821 = vld [vmem:[#allocation2 + $0x20] sm:$0xff]
        %v1822 = vld [vmem:[#allocation2 + $0x28] sm:$0xff]
        %v1823 = vld [vmem:[#allocation2 + $0x30] sm:$0xff]
        %v1824 = vld [vmem:[#allocation2 + $0x38] sm:$0x1]
        %v1825 = vsel %vm1129, 0, %v1820
        %v1826 = vsel %vm1130, 0, %v1821
        %v1827 = vsel %vm1131, 0, %v1822
        %v1828 = vsel %vm1132, 0, %v1823
        %v1829 = vsel %vm1133, 0, %v1824
        %1830 = vrot.lane.b32.xlu0 %v1216, 4
        %v1831 = vpop.permute.xlu0 %1830
        %1832 = vrot.lane.b32.xlu0 %v1224, 4
        %v1833 = vpop.permute.xlu0 %1832
        %1834 = vrot.lane.b32.xlu0 %v1232, 4
        %v1835 = vpop.permute.xlu0 %1834
        %1836 = vrot.lane.b32.xlu0 %v1240, 4
        %v1837 = vpop.permute.xlu0 %1836
        %1842 = vrot.lane.b32.xlu0 %v1599, 8
        %v1843 = vpop.permute.xlu0 %1842
        %1844 = vrot.lane.b32.xlu0 %v1600, 8
        %v1845 = vpop.permute.xlu0 %1844
        %1846 = vrot.lane.b32.xlu0 %v1601, 8
        %v1847 = vpop.permute.xlu0 %1846
        %1848 = vrot.lane.b32.xlu0 %v1602, 8
        %v1849 = vpop.permute.xlu0 %1848
        %v1851 = vshrl.u32 %v1825, 16
        %v1853 = vshll.u32 %v1825, 16
        %v1855 = vrot.slane %v1853, 1
        %v1856 = vor.u32 %v1851, %v1855
        %v1858 = vshll.u32 %v1826, 16
        %v1860 = vrot.slane %v1858, 1
        %v1861 = vsel %vm775, %v1856, %v1860
        %v1862 = vshrl.u32 %v1826, 16
        %v1864 = vor.u32 %v1862, %v1860
        %v1866 = vshll.u32 %v1827, 16
        %v1868 = vrot.slane %v1866, 1
        %v1869 = vsel %vm775, %v1864, %v1868
        %v1870 = vshrl.u32 %v1827, 16
        %v1872 = vor.u32 %v1870, %v1868
        %v1874 = vshll.u32 %v1828, 16
        %v1876 = vrot.slane %v1874, 1
        %v1877 = vsel %vm775, %v1872, %v1876
        %v1878 = vshrl.u32 %v1828, 16
        %v1880 = vor.u32 %v1878, %v1876
        %v1882 = vshll.u32 %v1829, 16
        %v1884 = vrot.slane %v1882, 1
        %v1885 = vsel %vm775, %v1880, %v1884
        %1886 = vrot.lane.b32.xlu0 %v1861, 12
        %v1887 = vpop.permute.xlu0 %1886
        %1888 = vrot.lane.b32.xlu0 %v1869, 12
        %v1889 = vpop.permute.xlu0 %1888
        %1890 = vrot.lane.b32.xlu0 %v1877, 12
        %v1891 = vpop.permute.xlu0 %1890
        %1892 = vrot.lane.b32.xlu0 %v1885, 12
        %v1893 = vpop.permute.xlu0 %1892
        %v1895 = vsel %vm586, %v728, %v1831
        %v1897 = vsel %vm586, %v729, %v1833
        %v1899 = vsel %vm586, %v730, %v1835
        %v1901 = vsel %vm586, %v818, %v1837
        %v1903 = vsel %vm913, %v1895, %v1843
        %v1905 = vsel %vm913, %v1897, %v1845
        %v1907 = vsel %vm913, %v1899, %v1847
        %v1909 = vsel %vm913, %v1901, %v1849
        %v1911 = vsel %vm924, %v1903, %v1887
        %v1913 = vsel %vm924, %v1905, %v1889
        %v1915 = vsel %vm924, %v1907, %v1891
        %v1917 = vsel %vm924, %v1909, %v1893
        %s1918 = scalar_lea.vmem %s4, 24
        %v1919 = vld [vmem:[%s1918] sm:$0xf]
        %v1920 = vld [vmem:[%s1918 + $0x4] sm:$0xf]
        %v1923 = vunpack.c.l.b16 %v1919
        %v1924 = vunpack.c.l.b16 %v1920
        %v1925 = vpack.c.b16 %v1924, %v1923
        %v1927 = vsel %vm430, %v1911, 0
        %v1929 = vsel %vm430, %v1913, 0
        %v1931 = vsel %vm430, %v1915, 0
        %v1933 = vsel %vm430, %v1917, 0
        %1935 = vmatprep.subr.bf16.mxu0 0
        %1936 = vmatpush1.bf16.msra.mxu0 %v1925
        %1937 = vmatprep.subr.bf16.mxu0 0
        %1938 = vmatpush1.bf16.msra.mxu0 0
        %1939 = vmatprep.subr.bf16.mxu0 0
        %1940 = vmatpush1.bf16.msra.mxu0 0
        %1941 = vmatprep.subr.bf16.mxu0 0
        %1942 = vmatpush1.bf16.msra.mxu0 0
        %1943 = vmatprep.subr.bf16.mxu0 0
        %1944 = vmatpush1.bf16.msra.mxu0 0
        %1945 = vmatprep.subr.bf16.mxu0 0
        %1946 = vmatpush1.bf16.msra.mxu0 0
        %1947 = vmatprep.subr.bf16.mxu0 0
        %1948 = vmatpush1.bf16.msra.mxu0 0
        %1949 = vmatprep.subr.bf16.mxu0 0
        %1950 = vmatpush1.bf16.msra.mxu0 0
        %1951 = vmatprep.subr.bf16.mxu0 0
        %1952 = vmatpush1.bf16.msra.mxu0 0
        %1953 = vmatprep.subr.bf16.mxu0 0
        %1954 = vmatpush1.bf16.msra.mxu0 0
        %1955 = vmatprep.subr.bf16.mxu0 0
        %1956 = vmatpush1.bf16.msra.mxu0 0
        %1957 = vmatprep.subr.bf16.mxu0 0
        %1958 = vmatpush1.bf16.msra.mxu0 0
        %1959 = vmatprep.subr.bf16.mxu0 0
        %1960 = vmatpush1.bf16.msra.mxu0 0
        %1961 = vmatprep.subr.bf16.mxu0 0
        %1962 = vmatpush1.bf16.msra.mxu0 0
        %1963 = vmatprep.subr.bf16.mxu0 0
        %1964 = vmatpush1.bf16.msra.mxu0 0
        %1965 = vmatprep.subr.bf16.mxu0 0
        %1966 = vmatpush1.bf16.msra.mxu0 0
        %1967 = vmatprep.mubr.bf16.mxu0 0
        %1968 = vmatmul.mubr.bf16.gmra.mrb[0].mxu0 %v1927
        %v1969 = vpop.f32.mrb[0].mxu0
        %v1970 = vadd.f32 0.0, %v1969
        %v1971 = vpop.f32.mrb[0].mxu0
        %v1972 = vpop.f32.mrb[0].mxu0
        %v1973 = vadd.f32 0.0, %v1972
        %v1974 = vpop.f32.mrb[0].mxu0
        %1975 = vmatprep.mubr.bf16.mxu0 0
        %1976 = vmatmul.mubr.bf16.gmra.mrb[0].mxu0 %v1929
        %v1977 = vpop.f32.mrb[0].mxu0
        %v1978 = vadd.f32 0.0, %v1977
        %v1979 = vpop.f32.mrb[0].mxu0
        %v1980 = vpop.f32.mrb[0].mxu0
        %v1981 = vadd.f32 0.0, %v1980
        %v1982 = vpop.f32.mrb[0].mxu0
        %1983 = vmatprep.mubr.bf16.mxu0 0
        %1984 = vmatmul.mubr.bf16.gmra.mrb[0].mxu0 %v1931
        %v1985 = vpop.f32.mrb[0].mxu0
        %v1986 = vadd.f32 0.0, %v1985
        %v1987 = vpop.f32.mrb[0].mxu0
        %v1988 = vpop.f32.mrb[0].mxu0
        %v1989 = vadd.f32 0.0, %v1988
        %v1990 = vpop.f32.mrb[0].mxu0
        %1991 = vmatprep.mubr.bf16.mxu0 0
        %1992 = vmatmul.mubr.bf16.gmra.mrb[0].mxu0 %v1933
        %v1993 = vpop.f32.mrb[0].mxu0
        %v1994 = vadd.f32 0.0, %v1993
        %v1995 = vpop.f32.mrb[0].mxu0
        %v1996 = vpop.f32.mrb[0].mxu0
        %v1997 = vadd.f32 0.0, %v1996
        %v1998 = vpop.f32.mrb[0].mxu0
        %1999 = vdwg.mxu0
        %2008 = vrot.lane.b32.xlu0 %v1970, 4
        %v2009 = vpop.permute.xlu0 %2008
        %2010 = vrot.lane.b32.xlu0 %v1973, 4
        %v2011 = vpop.permute.xlu0 %2010
        %2012 = vrot.lane.b32.xlu0 %v1978, 4
        %v2013 = vpop.permute.xlu0 %2012
        %2014 = vrot.lane.b32.xlu0 %v1981, 4
        %v2015 = vpop.permute.xlu0 %2014
        %2016 = vrot.lane.b32.xlu0 %v1986, 4
        %v2017 = vpop.permute.xlu0 %2016
        %2018 = vrot.lane.b32.xlu0 %v1989, 4
        %v2019 = vpop.permute.xlu0 %2018
        %2020 = vrot.lane.b32.xlu0 %v1994, 4
        %v2021 = vpop.permute.xlu0 %2020
        %2022 = vrot.lane.b32.xlu0 %v1997, 4
        %v2023 = vpop.permute.xlu0 %2022
        %v2032 = vsel %vm586, %v1790, %v2009
        %v2033 = vsel %vm586, %v1793, %v2011
        %v2034 = vsel %vm586, %v1798, %v2013
        %v2035 = vsel %vm586, %v1801, %v2015
        %v2036 = vsel %vm586, %v1806, %v2017
        %v2037 = vsel %vm586, %v1809, %v2019
        %v2038 = vsel %vm586, %v1814, %v2021
        %v2039 = vsel %vm586, %v1817, %v2023
        %v2040 = vld [vmem:[%s5] sm:$0x1]
        %v2042 = vlaneseq
        %v2043 = vshrl.u32 %v2042, 7
        %v2044 = vsub.s32 0, %v2043
        %v2045 = vrot.slane %v2040, %v2044
        %v2047 = vmul.f32 %v2032, %v2045
        %v2048 = vmul.f32 %v2033, %v2045
        %v2049 = vmul.f32 %v2034, %v2045
        %v2050 = vmul.f32 %v2035, %v2045
        %v2051 = vmul.f32 %v2036, %v2045
        %v2052 = vmul.f32 %v2037, %v2045
        %v2053 = vmul.f32 %v2038, %v2045
        %v2054 = vmul.f32 %v2039, %v2045
        %v2055 = vld [vmem:[%s6] sm:$0x1]
        %v2057 = vlaneseq
        %v2058 = vshrl.u32 %v2057, 7
        %v2059 = vsub.s32 0, %v2058
        %v2060 = vrot.slane %v2055, %v2059
        %v2062 = vadd.f32 %v2047, %v2060
        %v2063 = vadd.f32 %v2048, %v2060
        %v2064 = vadd.f32 %v2049, %v2060
        %v2065 = vadd.f32 %v2050, %v2060
        %v2066 = vadd.f32 %v2051, %v2060
        %v2067 = vadd.f32 %v2052, %v2060
        %v2068 = vadd.f32 %v2053, %v2060
        %v2069 = vadd.f32 %v2054, %v2060
        %v2070 = vmax.f32 %v2062, 0.0
        %v2071 = vmax.f32 %v2063, 0.0
        %v2072 = vmax.f32 %v2064, 0.0
        %v2073 = vmax.f32 %v2065, 0.0
        %v2074 = vmax.f32 %v2066, 0.0
        %v2075 = vmax.f32 %v2067, 0.0
        %v2076 = vmax.f32 %v2068, 0.0
        %v2077 = vmax.f32 %v2069, 0.0
        %v2078 = vpack.c.bf16 %v2071, %v2070
        %v2079 = vpack.c.bf16 %v2073, %v2072
        %v2080 = vpack.c.bf16 %v2075, %v2074
        %v2081 = vpack.c.bf16 %v2077, %v2076
        %v2082 = vld [vmem:[%s7] sm:$0xf]
        %v2084 = vsel %vm913, %v2078, 0
        %v2087 = vsel %vm913, %v2079, 0
        %v2090 = vsel %vm913, %v2080, 0
        %v2093 = vsel %vm913, %v2081, 0
        %v2096 = vsel %vm1450, %v2082, 0
        %2098 = vmatprep.subr.bf16.mxu0 0
        %2099 = vmatpush1.bf16.msra.mxu0 %v2096
        %2100 = vmatprep.subr.bf16.mxu0 0
        %2101 = vmatpush1.bf16.msra.mxu0 0
        %2102 = vmatprep.subr.bf16.mxu0 0
        %2103 = vmatpush1.bf16.msra.mxu0 0
        %2104 = vmatprep.subr.bf16.mxu0 0
        %2105 = vmatpush1.bf16.msra.mxu0 0
        %2106 = vmatprep.subr.bf16.mxu0 0
        %2107 = vmatpush1.bf16.msra.mxu0 0
        %2108 = vmatprep.subr.bf16.mxu0 0
        %2109 = vmatpush1.bf16.msra.mxu0 0
        %2110 = vmatprep.subr.bf16.mxu0 0
        %2111 = vmatpush1.bf16.msra.mxu0 0
        %2112 = vmatprep.subr.bf16.mxu0 0
        %2113 = vmatpush1.bf16.msra.mxu0 0
        %2114 = vmatprep.subr.bf16.mxu0 0
        %2115 = vmatpush1.bf16.msra.mxu0 0
        %2116 = vmatprep.subr.bf16.mxu0 0
        %2117 = vmatpush1.bf16.msra.mxu0 0
        %2118 = vmatprep.subr.bf16.mxu0 0
        %2119 = vmatpush1.bf16.msra.mxu0 0
        %2120 = vmatprep.subr.bf16.mxu0 0
        %2121 = vmatpush1.bf16.msra.mxu0 0
        %2122 = vmatprep.subr.bf16.mxu0 0
        %2123 = vmatpush1.bf16.msra.mxu0 0
        %2124 = vmatprep.subr.bf16.mxu0 0
        %2125 = vmatpush1.bf16.msra.mxu0 0
        %2126 = vmatprep.subr.bf16.mxu0 0
        %2127 = vmatpush1.bf16.msra.mxu0 0
        %2128 = vmatprep.subr.bf16.mxu0 0
        %2129 = vmatpush1.bf16.msra.mxu0 0
        %2130 = vmatprep.mubr.bf16.mxu0 0
        %2131 = vmatmul.mubr.bf16.gmra.mrb[0].mxu0 %v2084
        %v2132 = vpop.f32.mrb[0].mxu0
        %v2133 = vadd.f32 0.0, %v2132
        %v2134 = vpop.f32.mrb[0].mxu0
        %v2135 = vpop.f32.mrb[0].mxu0
        %v2136 = vadd.f32 0.0, %v2135
        %v2137 = vpop.f32.mrb[0].mxu0
        %2138 = vmatprep.mubr.bf16.mxu0 0
        %2139 = vmatmul.mubr.bf16.gmra.mrb[0].mxu0 %v2087
        %v2140 = vpop.f32.mrb[0].mxu0
        %v2141 = vadd.f32 0.0, %v2140
        %v2142 = vpop.f32.mrb[0].mxu0
        %v2143 = vpop.f32.mrb[0].mxu0
        %v2144 = vadd.f32 0.0, %v2143
        %v2145 = vpop.f32.mrb[0].mxu0
        %2146 = vmatprep.mubr.bf16.mxu0 0
        %2147 = vmatmul.mubr.bf16.gmra.mrb[0].mxu0 %v2090
        %v2148 = vpop.f32.mrb[0].mxu0
        %v2149 = vadd.f32 0.0, %v2148
        %v2150 = vpop.f32.mrb[0].mxu0
        %v2151 = vpop.f32.mrb[0].mxu0
        %v2152 = vadd.f32 0.0, %v2151
        %v2153 = vpop.f32.mrb[0].mxu0
        %2154 = vmatprep.mubr.bf16.mxu0 0
        %2155 = vmatmul.mubr.bf16.gmra.mrb[0].mxu0 %v2093
        %v2156 = vpop.f32.mrb[0].mxu0
        %v2157 = vadd.f32 0.0, %v2156
        %v2158 = vpop.f32.mrb[0].mxu0
        %v2159 = vpop.f32.mrb[0].mxu0
        %v2160 = vadd.f32 0.0, %v2159
        %v2161 = vpop.f32.mrb[0].mxu0
        %2162 = vdwg.mxu0
        %v2163 = vld [vmem:[%s8] sm:$0x1]
        %v2165 = vlaneseq
        %v2166 = vshrl.u32 %v2165, 7
        %v2167 = vsub.s32 0, %v2166
        %v2168 = vrot.slane %v2163, %v2167
        %v2170 = vmul.f32 %v2133, %v2168
        %v2171 = vmul.f32 %v2136, %v2168
        %v2172 = vmul.f32 %v2141, %v2168
        %v2173 = vmul.f32 %v2144, %v2168
        %v2174 = vmul.f32 %v2149, %v2168
        %v2175 = vmul.f32 %v2152, %v2168
        %v2176 = vmul.f32 %v2157, %v2168
        %v2177 = vmul.f32 %v2160, %v2168
        %v2178 = vld [vmem:[%s9] sm:$0x1]
        %v2180 = vlaneseq
        %v2181 = vshrl.u32 %v2180, 7
        %v2182 = vsub.s32 0, %v2181
        %v2183 = vrot.slane %v2178, %v2182
        %v2185 = vadd.f32 %v2170, %v2183
        %v2186 = vadd.f32 %v2171, %v2183
        %v2187 = vadd.f32 %v2172, %v2183
        %v2188 = vadd.f32 %v2173, %v2183
        %v2189 = vadd.f32 %v2174, %v2183
        %v2190 = vadd.f32 %v2175, %v2183
        %v2191 = vadd.f32 %v2176, %v2183
        %v2192 = vadd.f32 %v2177, %v2183
        %v2193 = vmax.f32 %v2185, 0.0
        %v2194 = vmax.f32 %v2186, 0.0
        %v2195 = vmax.f32 %v2187, 0.0
        %v2196 = vmax.f32 %v2188, 0.0
        %v2197 = vmax.f32 %v2189, 0.0
        %v2198 = vmax.f32 %v2190, 0.0
        %v2199 = vmax.f32 %v2191, 0.0
        %v2200 = vmax.f32 %v2192, 0.0
        %v2201 = vpack.c.bf16 %v2194, %v2193
        %v2202 = vpack.c.bf16 %v2196, %v2195
        %v2203 = vpack.c.bf16 %v2198, %v2197
        %v2204 = vpack.c.bf16 %v2200, %v2199
        %v2209 = vunpack.c.l.b16 %v2201
        %v2210 = vunpack.c.h.b16 %v2201
        %v2211 = vunpack.c.l.b16 %v2202
        %v2212 = vunpack.c.h.b16 %v2202
        %v2213 = vunpack.c.l.b16 %v2203
        %v2214 = vunpack.c.h.b16 %v2203
        %v2215 = vunpack.c.l.b16 %v2204
        %v2216 = vunpack.c.h.b16 %v2204
        %v2217 = vpack.c.b16 %v2209, %v2209
        %v2218 = vpack.c.b16 %v2210, %v2210
        %v2219 = vpack.c.b16 %v2211, %v2211
        %v2220 = vpack.c.b16 %v2212, %v2212
        %v2221 = vpack.c.b16 %v2213, %v2213
        %v2222 = vpack.c.b16 %v2214, %v2214
        %v2223 = vpack.c.b16 %v2215, %v2215
        %v2224 = vpack.c.b16 %v2216, %v2216
        %s2233 = scalar_lea.vmem %s366, 8 [#allocation3]
        %2234 = vst.msk [vmem:[%s2233] sm:$0xf] %vm1589, %v2217
        %2235 = vst.msk [vmem:[%s2233 + $0x4] sm:$0xf] %vm1589, %v2218
        %2236 = vst.msk [vmem:[%s2233 + $0x10] sm:$0xf] %vm1589, %v2219
        %2237 = vst.msk [vmem:[%s2233 + $0x14] sm:$0xf] %vm1589, %v2220
        %2238 = vst.msk [vmem:[%s2233 + $0x20] sm:$0xf] %vm1589, %v2221
        %2239 = vst.msk [vmem:[%s2233 + $0x24] sm:$0xf] %vm1589, %v2222
        %2240 = vst.msk [vmem:[%s2233 + $0x30] sm:$0xf] %vm1589, %v2223
        %2241 = vst.msk [vmem:[%s2233 + $0x34] sm:$0xf] %vm1589, %v2224
        %s2242 = sand.u32 %s261, 1
        %s2243 = scalar_lea.sflag [#allocation4], %s2242
        %s2244 = sand.u32 %s261, 1
        %s2245 = smul.addr %s2244, 64
        %s2246 = scalar_lea.vmem [#allocation3], %s2245
        // Predicated region
        $region69: #{tpu_custom_call.1} parent=59 // pred_check
          %p2247 = pneg %p271
        $region70: #{tpu_custom_call.1} parent=59 // pred_check_branch
          %2249 = sbr.rel (%p2247) target = $region72
        $region71: #{tpu_custom_call.1} parent=59 // pred_region
          %s2250 = smul.u32 4, %s29
          %s2252 = ssub.s32 1024, 1024
          %2253 = vsyncadd %s2243, %s2252
          %s2254 = smul.addr %s2250, 4
          %s2255 = smul.addr %s28, 64
          %s2256 = sadd.s32 %s2254, %s2255
          %s2257 = smul.addr %s2256, 64
          %s2258 = scalar_lea.hbm %s10, %s2257
          %s2259 = sshll.u32 %s2246, 4
          %s2260 = int_to_ptr.vmem [resolvable:$true] %s2259
          %2265 = dma.vmem_to_hbm [thread:$0]  %s2260, 1024, %s2258, %s2243, 64, 64, 4
        $region72: #{tpu_custom_call.1} parent=59 // pred_fallthru
          _
      $region60: #{tpu_custom_call.1} parent=5 // pred_fallthru
        _
      %p2266 = scmp.le.s32.totalorder 2, %s19
      // Predicated region
      $region73: #{tpu_custom_call.1} parent=5 // pred_check
        %p2267 = pneg %p2266
      $region74: #{tpu_custom_call.1} parent=5 // pred_check_branch
        %2269 = sbr.rel (%p2267) target = $region76
      $region75: #{tpu_custom_call.1} parent=5 // pred_region
        %s2270 = ssub.s32 %s19, 2
        // Predicated region
        $region77: #{tpu_custom_call.1} parent=75 // pred_check
          %p2271 = pneg %p277
        $region78: #{tpu_custom_call.1} parent=75 // pred_check_branch
          %2273 = sbr.rel (%p2271) target = $region80
        $region79: #{tpu_custom_call.1} parent=75 // pred_region
          %s2274 = sand.u32 %s262, 1
          %s2275 = scalar_lea.sflag [#allocation4], %s2274
          %s2276 = sand.u32 %s262, 1
          %s2277 = smul.addr %s2276, 64
          %s2278 = scalar_lea.vmem [#allocation3], %s2277
          %2279 = dma.done %s2275, 1024
        $region80: #{tpu_custom_call.1} parent=75 // pred_fallthru
          _
      $region76: #{tpu_custom_call.1} parent=5 // pred_fallthru
        _
    $region6: #{tpu_custom_call.1} parent=1 // loop_footer
      %s23 = sadd.s32 1, %s19
    $region7: #{tpu_custom_call.1} parent=1 // loop_footer_branch
      %18 = sbr.rel target = $region3
    $region8: #{tpu_custom_call.1} parent=1 // loop_exit
      _
    %2280 = vsyncpa [#allocation4], 1
    %s2281 = scalar_lea.sflag [#allocation4], 1
    %2282 = vsyncpa %s2281, 1

</llo_original>
